<compile_context>
chip_gen: v6e
topology: v6e:2x2x1
jax: 0.10.0
libtpu: 0.0.40
codegen_flags: <defaults>
</compile_context>

<pallas_src>
import numpy as np
import jax
import jax.numpy as jnp
from jax.experimental import pallas as pl
from jax.experimental.pallas import tpu as pltpu


# ----------------------------- parameter setup (glue, plain numpy) -----------

def _dct_coeff(n, k, N):
    return np.cos(np.pi / N * (n + 0.5) * k)


def _idct_coeff(n, k, N):
    return (int(n == 0) * (-0.5) + np.cos(np.pi / N * (k + 0.5) * n)) * np.sqrt(1.0 / (2.0 * N))


def _dct_mat8():
    D = np.zeros((8, 8), dtype=np.float64)
    for k in range(8):
        for n in range(8):
            D[k, n] = _dct_coeff(n, k, 8)
    return D


def _idct_mat8():
    M = np.zeros((8, 8), dtype=np.float64)
    for k in range(8):
        for n in range(8):
            M[k, n] = _idct_coeff(n, k, 8)
    return M


def _zigzag_mask8(keep_count):
    mask = np.zeros((8, 8), dtype=np.float32)
    index_order = sorted(
        ((x, y) for x in range(8) for y in range(8)),
        key=lambda p: (p[0] + p[1], -p[1] if (p[0] + p[1]) % 2 else p[1]))
    for i, j in index_order[:keep_count]:
        mask[i, j] = 1.0
    return mask


def _round_up(v, m):
    return ((v + m - 1) // m) * m


# ----------------------------- Pallas kernel ---------------------------------

def jpeg_kernel(x_ref, dh_ref, dwt_ref, ih_ref, iwt_ref, mask_ref, o_ref):
    TH = dh_ref.shape[0]

    r = x_ref[0, 0, :, :]
    g = x_ref[0, 1, :, :]
    b = x_ref[0, 2, :, :]

    # rgb -> yuv (elementwise, VPU)
    y = 0.299 * r + 0.587 * g + 0.114 * b
    u = -0.14713 * r + -0.28886 * g + 0.436 * b
    v = 0.615 * r + -0.51499 * g + -0.10001 * b

    dh = dh_ref[...]          # (TH, TH)  = kron(I, D8)
    dwt = dwt_ref[...]        # (TW, TW)  = kron(I, D8^T)
    ih = ih_ref[...]          # (TH, TH)  = kron(I, M8)
    iwt = iwt_ref[...]        # (TW, TW)  = kron(I, M8^T)

    # column (width) DCT for all three channels in one matmul: (3*TH, TW)@(TW, TW)
    yuv = jnp.concatenate([y, u, v], axis=0)
    t = jnp.dot(yuv, dwt, preferred_element_type=jnp.float32)

    # per-channel row (height) DCT, zigzag mask, row IDCT  (MXU)
    recs = []
    for c in range(3):
        tc = t[c * TH:(c + 1) * TH]
        coeff = jnp.dot(dh, tc, preferred_element_type=jnp.float32) * mask_ref[c]
        recs.append(jnp.dot(ih, coeff, preferred_element_type=jnp.float32))

    # column (width) IDCT for all three channels in one matmul
    rec = jnp.dot(jnp.concatenate(recs, axis=0), iwt,
                  preferred_element_type=jnp.float32)

    yy = rec[0:TH]
    uu = rec[TH:2 * TH]
    vv = rec[2 * TH:3 * TH]

    # yuv -> rgb, stored per-channel directly (no stack temp)
    o_ref[0, 0, :, :] = yy + 1.13983 * vv
    o_ref[0, 1, :, :] = yy + -0.39465 * uu + -0.5806 * vv
    o_ref[0, 2, :, :] = yy + 2.03211 * uu


# ----------------------------- wrapper ---------------------------------------

def jpeg_compression(x, yuv_keep_weights=(25, 9, 9), tile_h=128, tile_w=256):
    """x: (B, 3, H, W) float32, NCHW (same convention as the PyTorch module)."""
    B, C, H, W = x.shape
    assert C == 3

    # pad to multiples of 8 (as the torch module does); extra padding up to the
    # tile size only adds all-zero 8x8 blocks, which are cropped at the end.
    Hp8 = _round_up(H, 8)
    Wp8 = _round_up(W, 8)

    if Hp8 <= tile_h:
        TH, Hp = Hp8, Hp8                 # single tile spans full height
    else:
        TH = tile_h
        assert TH % 8 == 0
        Hp = _round_up(Hp8, TH)

    if Wp8 <= tile_w:
        TW, Wp = Wp8, Wp8                 # single tile spans full width
    else:
        TW = tile_w
        assert TW % 128 == 0 and TW % 8 == 0   # lane-dense output blocks
        Wp = _round_up(Wp8, TW)

    xp = jnp.pad(x, ((0, 0), (0, 0), (0, Hp - H), (0, Wp - W)))

    # small, tile-sized (8-periodic) transform matrices and zigzag mask
    D = _dct_mat8()
    M = _idct_mat8()
    DH = np.kron(np.eye(TH // 8), D).astype(np.float32)       # (TH, TH)
    DWt = np.kron(np.eye(TW // 8), D.T).astype(np.float32)    # (TW, TW)
    IH = np.kron(np.eye(TH // 8), M).astype(np.float32)       # (TH, TH)
    IWt = np.kron(np.eye(TW // 8), M.T).astype(np.float32)    # (TW, TW)
    mask = np.stack(
        [np.tile(_zigzag_mask8(k), (TH // 8, TW // 8)) for k in yuv_keep_weights],
        axis=0).astype(np.float32)                             # (3, TH, TW)

    grid = (B, Hp // TH, Wp // TW)

    out = pl.pallas_call(
        jpeg_kernel,
        out_shape=jax.ShapeDtypeStruct((B, 3, Hp, Wp), jnp.float32),
        grid=grid,
        in_specs=[
            pl.BlockSpec((1, 3, TH, TW), lambda b, i, j: (b, 0, i, j)),
            pl.BlockSpec((TH, TH), lambda b, i, j: (0, 0)),
            pl.BlockSpec((TW, TW), lambda b, i, j: (0, 0)),
            pl.BlockSpec((TH, TH), lambda b, i, j: (0, 0)),
            pl.BlockSpec((TW, TW), lambda b, i, j: (0, 0)),
            pl.BlockSpec((3, TH, TW), lambda b, i, j: (0, 0, 0)),
        ],
        out_specs=pl.BlockSpec((1, 3, TH, TW), lambda b, i, j: (b, 0, i, j)),
        compiler_params=pltpu.CompilerParams(
            dimension_semantics=("parallel", "parallel", "parallel"),
            vmem_limit_bytes=48 * 1024 * 1024,
        ),
    )(xp, jnp.asarray(DH), jnp.asarray(DWt), jnp.asarray(IH), jnp.asarray(IWt),
      jnp.asarray(mask))

    # crop away the zero padding (matches the PyTorch module's final slice)
    return out[:, :, :H, :W]


# ----------------------------- independent numpy reference -------------------

def _ref_forward(x_np, yuv_keep_weights=(25, 9, 9)):
    B, C, H, W = x_np.shape
    pad_h = (8 - H % 8) % 8
    pad_w = (8 - W % 8) % 8
    xp = np.pad(x_np, ((0, 0), (0, 0), (0, pad_h), (0, pad_w)))
    Hp, Wp = H + pad_h, W + pad_w
    r, g, b = xp[:, 0], xp[:, 1], xp[:, 2]
    yuv = np.stack([
        0.299 * r + 0.587 * g + 0.114 * b,
        -0.14713 * r + -0.28886 * g + 0.436 * b,
        0.615 * r + -0.51499 * g + -0.10001 * b], axis=1)
    D = _dct_mat8()
    M = _idct_mat8()
    blocks = yuv.reshape(B, 3, Hp // 8, 8, Wp // 8, 8)
    coeff = np.einsum('kn,bchnwm,lm->bchkwl', D, blocks, D)
    mask8 = np.stack([_zigzag_mask8(k) for k in yuv_keep_weights], axis=0)
    coeff = coeff * mask8[None, :, None, :, None, :]
    rec = np.einsum('kn,bchnwm,lm->bchkwl', M, coeff, M)
    rec = rec.reshape(B, 3, Hp, Wp)
    yy, uu, vv = rec[:, 0], rec[:, 1], rec[:, 2]
    rgb = np.stack([
        yy + 1.13983 * vv,
        yy + -0.39465 * uu + -0.5806 * vv,
        yy + 2.03211 * uu], axis=1)
    return rgb[:, :, :H, :W]


# ----------------------------- demo -------------------------------------------

if __name__ == "__main__":
    key = jax.random.PRNGKey(0)
    B, C, H, W = 2, 3, 20, 28        # exercises the pad-to-8 path (-> 24 x 32)
    x = jax.random.uniform(key, (B, C, H, W), dtype=jnp.float32)

    ref = _ref_forward(np.asarray(x))

    # default tiles (single tile spans this small image)
    out = jax.block_until_ready(jpeg_compression(x))
    np.testing.assert_allclose(np.asarray(out), ref, rtol=1e-4, atol=1e-4)

    # exercise the multi-tile spatial grid (3 tiles along H, full-width tile)
    out_tiled = jax.block_until_ready(jpeg_compression(x, tile_h=8))
    np.testing.assert_allclose(np.asarray(out_tiled), ref, rtol=1e-4, atol=1e-4)

    print("KERNEL_OK")
</pallas_src>

<mosaic_0001>
module attributes {stable_mosaic.version = 11 : i64} {
  func.func @jpeg_kernel(%arg0: i32, %arg1: i32, %arg2: i32, %arg3: memref<1x3x24x32xf32, #tpu.memory_space<vmem>>, %arg4: memref<24x24xf32, #tpu.memory_space<vmem>>, %arg5: memref<32x32xf32, #tpu.memory_space<vmem>>, %arg6: memref<24x24xf32, #tpu.memory_space<vmem>>, %arg7: memref<32x32xf32, #tpu.memory_space<vmem>>, %arg8: memref<3x24x32xf32, #tpu.memory_space<vmem>>, %arg9: memref<1x3x24x32xf32, #tpu.memory_space<vmem>>) attributes {dimension_semantics = [#tpu.dimension_semantics<parallel>, #tpu.dimension_semantics<parallel>, #tpu.dimension_semantics<parallel>], iteration_bounds = array<i64: 2, 1, 1>, scalar_prefetch = 0 : i64, scratch_operands = 0 : i64, tpu.core_type = #tpu.core_type<tc>, window_params = [{transform_indices = @transform_0, window_bounds = array<i64: 1, 3, 24, 32>}, {pipeline_mode = #tpu.pipeline_mode<synchronous>, transform_indices = @transform_1, window_bounds = array<i64: 24, 24>}, {pipeline_mode = #tpu.pipeline_mode<synchronous>, transform_indices = @transform_2, window_bounds = array<i64: 32, 32>}, {pipeline_mode = #tpu.pipeline_mode<synchronous>, transform_indices = @transform_3, window_bounds = array<i64: 24, 24>}, {pipeline_mode = #tpu.pipeline_mode<synchronous>, transform_indices = @transform_4, window_bounds = array<i64: 32, 32>}, {pipeline_mode = #tpu.pipeline_mode<synchronous>, transform_indices = @transform_5, window_bounds = array<i64: 3, 24, 32>}, {transform_indices = @transform_6, window_bounds = array<i64: 1, 3, 24, 32>}]} {
    %c0 = arith.constant 0 : index
    %c0_0 = arith.constant 0 : index
    %c0_1 = arith.constant 0 : index
    %c0_2 = arith.constant 0 : index
    %0 = vector.load %arg3[%c0, %c0_0, %c0_1, %c0_2] : memref<1x3x24x32xf32, #tpu.memory_space<vmem>>, vector<1x1x24x32xf32>
    %1 = vector.shape_cast %0 : vector<1x1x24x32xf32> to vector<24x32xf32>
    %c0_3 = arith.constant 0 : index
    %c1 = arith.constant 1 : index
    %c0_4 = arith.constant 0 : index
    %c0_5 = arith.constant 0 : index
    %2 = vector.load %arg3[%c0_3, %c1, %c0_4, %c0_5] : memref<1x3x24x32xf32, #tpu.memory_space<vmem>>, vector<1x1x24x32xf32>
    %3 = vector.shape_cast %2 : vector<1x1x24x32xf32> to vector<24x32xf32>
    %c0_6 = arith.constant 0 : index
    %c2 = arith.constant 2 : index
    %c0_7 = arith.constant 0 : index
    %c0_8 = arith.constant 0 : index
    %4 = vector.load %arg3[%c0_6, %c2, %c0_7, %c0_8] : memref<1x3x24x32xf32, #tpu.memory_space<vmem>>, vector<1x1x24x32xf32>
    %5 = vector.shape_cast %4 : vector<1x1x24x32xf32> to vector<24x32xf32>
    %cst = arith.constant 2.990000e-01 : f32
    %6 = vector.broadcast %cst : f32 to vector<24x32xf32>
    %7 = arith.mulf %6, %1 : vector<24x32xf32>
    %cst_9 = arith.constant 5.870000e-01 : f32
    %8 = vector.broadcast %cst_9 : f32 to vector<24x32xf32>
    %9 = arith.mulf %8, %3 : vector<24x32xf32>
    %10 = arith.addf %7, %9 : vector<24x32xf32>
    %cst_10 = arith.constant 1.140000e-01 : f32
    %11 = vector.broadcast %cst_10 : f32 to vector<24x32xf32>
    %12 = arith.mulf %11, %5 : vector<24x32xf32>
    %13 = arith.addf %10, %12 : vector<24x32xf32>
    %cst_11 = arith.constant -1.471300e-01 : f32
    %14 = vector.broadcast %cst_11 : f32 to vector<24x32xf32>
    %15 = arith.mulf %14, %1 : vector<24x32xf32>
    %cst_12 = arith.constant -2.888600e-01 : f32
    %16 = vector.broadcast %cst_12 : f32 to vector<24x32xf32>
    %17 = arith.mulf %16, %3 : vector<24x32xf32>
    %18 = arith.addf %15, %17 : vector<24x32xf32>
    %cst_13 = arith.constant 4.360000e-01 : f32
    %19 = vector.broadcast %cst_13 : f32 to vector<24x32xf32>
    %20 = arith.mulf %19, %5 : vector<24x32xf32>
    %21 = arith.addf %18, %20 : vector<24x32xf32>
    %cst_14 = arith.constant 6.150000e-01 : f32
    %22 = vector.broadcast %cst_14 : f32 to vector<24x32xf32>
    %23 = arith.mulf %22, %1 : vector<24x32xf32>
    %cst_15 = arith.constant -5.149900e-01 : f32
    %24 = vector.broadcast %cst_15 : f32 to vector<24x32xf32>
    %25 = arith.mulf %24, %3 : vector<24x32xf32>
    %26 = arith.addf %23, %25 : vector<24x32xf32>
    %cst_16 = arith.constant -1.000100e-01 : f32
    %27 = vector.broadcast %cst_16 : f32 to vector<24x32xf32>
    %28 = arith.mulf %27, %5 : vector<24x32xf32>
    %29 = arith.addf %26, %28 : vector<24x32xf32>
    %c0_17 = arith.constant 0 : index
    %c0_18 = arith.constant 0 : index
    %30 = vector.load %arg4[%c0_17, %c0_18] : memref<24x24xf32, #tpu.memory_space<vmem>>, vector<24x24xf32>
    %c0_19 = arith.constant 0 : index
    %c0_20 = arith.constant 0 : index
    %31 = vector.load %arg5[%c0_19, %c0_20] : memref<32x32xf32, #tpu.memory_space<vmem>>, vector<32x32xf32>
    %c0_21 = arith.constant 0 : index
    %c0_22 = arith.constant 0 : index
    %32 = vector.load %arg6[%c0_21, %c0_22] : memref<24x24xf32, #tpu.memory_space<vmem>>, vector<24x24xf32>
    %c0_23 = arith.constant 0 : index
    %c0_24 = arith.constant 0 : index
    %33 = vector.load %arg7[%c0_23, %c0_24] : memref<32x32xf32, #tpu.memory_space<vmem>>, vector<32x32xf32>
    %34 = tpu.concatenate %13, %21, %29 in 0 : vector<24x32xf32>, vector<24x32xf32>, vector<24x32xf32> -> vector<72x32xf32>
    %cst_25 = arith.constant dense<0.000000e+00> : vector<72x32xf32>
    %35 = tpu.matmul %34, %31, %cst_25 {dimension_numbers = #tpu.dot_dimension_numbers<[1], [0], [0], [1], [0, 0, 1, 1], [], []>} : vector<72x32xf32>, vector<32x32xf32>, vector<72x32xf32> -> vector<72x32xf32>
    %36 = vector.extract_strided_slice %35 {offsets = [0, 0], sizes = [24, 32], strides = [1, 1]} : vector<72x32xf32> to vector<24x32xf32>
    %cst_26 = arith.constant dense<0.000000e+00> : vector<24x32xf32>
    %37 = tpu.matmul %30, %36, %cst_26 {dimension_numbers = #tpu.dot_dimension_numbers<[1], [0], [0], [1], [0, 0, 1, 1], [], []>} : vector<24x24xf32>, vector<24x32xf32>, vector<24x32xf32> -> vector<24x32xf32>
    %c0_27 = arith.constant 0 : index
    %c0_28 = arith.constant 0 : index
    %c0_29 = arith.constant 0 : index
    %38 = vector.load %arg8[%c0_27, %c0_28, %c0_29] : memref<3x24x32xf32, #tpu.memory_space<vmem>>, vector<1x24x32xf32>
    %39 = vector.shape_cast %38 : vector<1x24x32xf32> to vector<24x32xf32>
    %40 = arith.mulf %37, %39 : vector<24x32xf32>
    %cst_30 = arith.constant dense<0.000000e+00> : vector<24x32xf32>
    %41 = tpu.matmul %32, %40, %cst_30 {dimension_numbers = #tpu.dot_dimension_numbers<[1], [0], [0], [1], [0, 0, 1, 1], [], []>} : vector<24x24xf32>, vector<24x32xf32>, vector<24x32xf32> -> vector<24x32xf32>
    %42 = vector.extract_strided_slice %35 {offsets = [24, 0], sizes = [24, 32], strides = [1, 1]} : vector<72x32xf32> to vector<24x32xf32>
    %cst_31 = arith.constant dense<0.000000e+00> : vector<24x32xf32>
    %43 = tpu.matmul %30, %42, %cst_31 {dimension_numbers = #tpu.dot_dimension_numbers<[1], [0], [0], [1], [0, 0, 1, 1], [], []>} : vector<24x24xf32>, vector<24x32xf32>, vector<24x32xf32> -> vector<24x32xf32>
    %c1_32 = arith.constant 1 : index
    %c0_33 = arith.constant 0 : index
    %c0_34 = arith.constant 0 : index
    %44 = vector.load %arg8[%c1_32, %c0_33, %c0_34] : memref<3x24x32xf32, #tpu.memory_space<vmem>>, vector<1x24x32xf32>
    %45 = vector.shape_cast %44 : vector<1x24x32xf32> to vector<24x32xf32>
    %46 = arith.mulf %43, %45 : vector<24x32xf32>
    %cst_35 = arith.constant dense<0.000000e+00> : vector<24x32xf32>
    %47 = tpu.matmul %32, %46, %cst_35 {dimension_numbers = #tpu.dot_dimension_numbers<[1], [0], [0], [1], [0, 0, 1, 1], [], []>} : vector<24x24xf32>, vector<24x32xf32>, vector<24x32xf32> -> vector<24x32xf32>
    %48 = vector.extract_strided_slice %35 {offsets = [48, 0], sizes = [24, 32], strides = [1, 1]} : vector<72x32xf32> to vector<24x32xf32>
    %cst_36 = arith.constant dense<0.000000e+00> : vector<24x32xf32>
    %49 = tpu.matmul %30, %48, %cst_36 {dimension_numbers = #tpu.dot_dimension_numbers<[1], [0], [0], [1], [0, 0, 1, 1], [], []>} : vector<24x24xf32>, vector<24x32xf32>, vector<24x32xf32> -> vector<24x32xf32>
    %c2_37 = arith.constant 2 : index
    %c0_38 = arith.constant 0 : index
    %c0_39 = arith.constant 0 : index
    %50 = vector.load %arg8[%c2_37, %c0_38, %c0_39] : memref<3x24x32xf32, #tpu.memory_space<vmem>>, vector<1x24x32xf32>
    %51 = vector.shape_cast %50 : vector<1x24x32xf32> to vector<24x32xf32>
    %52 = arith.mulf %49, %51 : vector<24x32xf32>
    %cst_40 = arith.constant dense<0.000000e+00> : vector<24x32xf32>
    %53 = tpu.matmul %32, %52, %cst_40 {dimension_numbers = #tpu.dot_dimension_numbers<[1], [0], [0], [1], [0, 0, 1, 1], [], []>} : vector<24x24xf32>, vector<24x32xf32>, vector<24x32xf32> -> vector<24x32xf32>
    %54 = tpu.concatenate %41, %47, %53 in 0 : vector<24x32xf32>, vector<24x32xf32>, vector<24x32xf32> -> vector<72x32xf32>
    %cst_41 = arith.constant dense<0.000000e+00> : vector<72x32xf32>
    %55 = tpu.matmul %54, %33, %cst_41 {dimension_numbers = #tpu.dot_dimension_numbers<[1], [0], [0], [1], [0, 0, 1, 1], [], []>} : vector<72x32xf32>, vector<32x32xf32>, vector<72x32xf32> -> vector<72x32xf32>
    %56 = vector.extract_strided_slice %55 {offsets = [0, 0], sizes = [24, 32], strides = [1, 1]} : vector<72x32xf32> to vector<24x32xf32>
    %57 = vector.extract_strided_slice %55 {offsets = [24, 0], sizes = [24, 32], strides = [1, 1]} : vector<72x32xf32> to vector<24x32xf32>
    %58 = vector.extract_strided_slice %55 {offsets = [48, 0], sizes = [24, 32], strides = [1, 1]} : vector<72x32xf32> to vector<24x32xf32>
    %cst_42 = arith.constant 1.139830e+00 : f32
    %59 = vector.broadcast %cst_42 : f32 to vector<24x32xf32>
    %60 = arith.mulf %59, %58 : vector<24x32xf32>
    %61 = arith.addf %56, %60 : vector<24x32xf32>
    %c0_43 = arith.constant 0 : index
    %c0_44 = arith.constant 0 : index
    %c0_45 = arith.constant 0 : index
    %c0_46 = arith.constant 0 : index
    %62 = vector.load %arg9[%c0_43, %c0_44, %c0_45, %c0_46] : memref<1x3x24x32xf32, #tpu.memory_space<vmem>>, vector<1x1x24x32xf32>
    %63 = vector.shape_cast %62 : vector<1x1x24x32xf32> to vector<24x32xf32>
    %64 = vector.shape_cast %61 : vector<24x32xf32> to vector<1x1x24x32xf32>
    tpu.vector_store %arg9[%c0_43, %c0_44, %c0_45, %c0_46], %64 {strides = array<i32>} : memref<1x3x24x32xf32, #tpu.memory_space<vmem>>, vector<1x1x24x32xf32>,
    %cst_47 = arith.constant -3.946500e-01 : f32
    %65 = vector.broadcast %cst_47 : f32 to vector<24x32xf32>
    %66 = arith.mulf %65, %57 : vector<24x32xf32>
    %67 = arith.addf %56, %66 : vector<24x32xf32>
    %cst_48 = arith.constant -5.806000e-01 : f32
    %68 = vector.broadcast %cst_48 : f32 to vector<24x32xf32>
    %69 = arith.mulf %68, %58 : vector<24x32xf32>
    %70 = arith.addf %67, %69 : vector<24x32xf32>
    %c0_49 = arith.constant 0 : index
    %c1_50 = arith.constant 1 : index
    %c0_51 = arith.constant 0 : index
    %c0_52 = arith.constant 0 : index
    %71 = vector.load %arg9[%c0_49, %c1_50, %c0_51, %c0_52] : memref<1x3x24x32xf32, #tpu.memory_space<vmem>>, vector<1x1x24x32xf32>
    %72 = vector.shape_cast %71 : vector<1x1x24x32xf32> to vector<24x32xf32>
    %73 = vector.shape_cast %70 : vector<24x32xf32> to vector<1x1x24x32xf32>
    tpu.vector_store %arg9[%c0_49, %c1_50, %c0_51, %c0_52], %73 {strides = array<i32>} : memref<1x3x24x32xf32, #tpu.memory_space<vmem>>, vector<1x1x24x32xf32>,
    %cst_53 = arith.constant 2.032110e+00 : f32
    %74 = vector.broadcast %cst_53 : f32 to vector<24x32xf32>
    %75 = arith.mulf %74, %57 : vector<24x32xf32>
    %76 = arith.addf %56, %75 : vector<24x32xf32>
    %c0_54 = arith.constant 0 : index
    %c2_55 = arith.constant 2 : index
    %c0_56 = arith.constant 0 : index
    %c0_57 = arith.constant 0 : index
    %77 = vector.load %arg9[%c0_54, %c2_55, %c0_56, %c0_57] : memref<1x3x24x32xf32, #tpu.memory_space<vmem>>, vector<1x1x24x32xf32>
    %78 = vector.shape_cast %77 : vector<1x1x24x32xf32> to vector<24x32xf32>
    %79 = vector.shape_cast %76 : vector<24x32xf32> to vector<1x1x24x32xf32>
    tpu.vector_store %arg9[%c0_54, %c2_55, %c0_56, %c0_57], %79 {strides = array<i32>} : memref<1x3x24x32xf32, #tpu.memory_space<vmem>>, vector<1x1x24x32xf32>,
    return
  }
  func.func @transform_0(%arg0: i32, %arg1: i32, %arg2: i32) -> (i32, i32, i32, i32) {
    %c0_i32 = arith.constant 0 : i32
    %c0_i32_0 = arith.constant 0 : i32
    return %arg0, %c0_i32, %arg1, %arg2 : i32, i32, i32, i32
  }
  func.func @transform_1(%arg0: i32, %arg1: i32, %arg2: i32) -> (i32, i32) {
    %c0_i32 = arith.constant 0 : i32
    %c0_i32_0 = arith.constant 0 : i32
    %c0_i32_1 = arith.constant 0 : i32
    return %c0_i32, %c0_i32_0 : i32, i32
  }
  func.func @transform_2(%arg0: i32, %arg1: i32, %arg2: i32) -> (i32, i32) {
    %c0_i32 = arith.constant 0 : i32
    %c0_i32_0 = arith.constant 0 : i32
    %c0_i32_1 = arith.constant 0 : i32
    return %c0_i32, %c0_i32_0 : i32, i32
  }
  func.func @transform_3(%arg0: i32, %arg1: i32, %arg2: i32) -> (i32, i32) {
    %c0_i32 = arith.constant 0 : i32
    %c0_i32_0 = arith.constant 0 : i32
    %c0_i32_1 = arith.constant 0 : i32
    return %c0_i32, %c0_i32_0 : i32, i32
  }
  func.func @transform_4(%arg0: i32, %arg1: i32, %arg2: i32) -> (i32, i32) {
    %c0_i32 = arith.constant 0 : i32
    %c0_i32_0 = arith.constant 0 : i32
    %c0_i32_1 = arith.constant 0 : i32
    return %c0_i32, %c0_i32_0 : i32, i32
  }
  func.func @transform_5(%arg0: i32, %arg1: i32, %arg2: i32) -> (i32, i32, i32) {
    %c0_i32 = arith.constant 0 : i32
    %c0_i32_0 = arith.constant 0 : i32
    %c0_i32_1 = arith.constant 0 : i32
    %c0_i32_2 = arith.constant 0 : i32
    return %c0_i32, %c0_i32_0, %c0_i32_1 : i32, i32, i32
  }
  func.func @transform_6(%arg0: i32, %arg1: i32, %arg2: i32) -> (i32, i32, i32, i32) {
    %c0_i32 = arith.constant 0 : i32
    %c0_i32_0 = arith.constant 0 : i32
    return %arg0, %c0_i32, %arg1, %arg2 : i32, i32, i32, i32
  }
}

</mosaic_0001>

<llo_original>
// kernel: tpu_custom_call.1
$region0: #{tpu_custom_call.1}
  #allocation0 [shape = 'u32[]', space=smem, size = 0x4, offset = 0x4, fixed_abs, tag = 'smem constant byte address 0x4 - core index']
  #allocation1 [shape = 'u32[144,128]{1,0:T(1,128)}', space=vmem, size = 0x12000, scoped, tag = 'internal scratch']
  %s0 = inlined_call_operand.hbm [shape: f32[2,3,24,32], index: 0, kind: input, shape index: {}]
  %s1 = inlined_call_operand.hbm [shape: f32[24,24], index: 1, kind: input, shape index: {}]
  %s2 = inlined_call_operand.hbm [shape: f32[32,32], index: 2, kind: input, shape index: {}]
  %s3 = inlined_call_operand.hbm [shape: f32[24,24], index: 3, kind: input, shape index: {}]
  %s4 = inlined_call_operand.hbm [shape: f32[32,32], index: 4, kind: input, shape index: {}]
  %s5 = inlined_call_operand.hbm [shape: f32[3,24,32], index: 5, kind: input, shape index: {}]
  %s6 = inlined_call_operand.hbm [shape: f32[2,3,24,32], index: 6, kind: output, shape index: {}]
  %s7 = sld [smem:[#allocation0]]
  $region81: #{tpu_custom_call.1} parent=0
    _
  %s9 = ssub.s32 1, %s7
  %s10 = scalar_select 0, %s9, %s7
  $region1: #{tpu_custom_call.1} parent=0
    #allocation2 [shape = 'u8[73728]{0}', space=vmem, size = 0x12000, scoped, tag = 'input window, operand 0']
    #allocation3 [shape = 's32[2]{0}', space=sflag, size = 0x8, scoped, tag = 'scoped memory for tpu_custom_call.1']
    #allocation4 [shape = 's32[2]{0}', space=sflag, size = 0x8, scoped, tag = 'scoped memory for tpu_custom_call.1']
    #allocation5 [shape = 'u8[12288]{0}', space=vmem, size = 0x3000, scoped, tag = 'input window, operand 1, single buffered']
    #allocation6 [shape = 's32[1]{0}', space=sflag, size = 0x4, scoped, tag = 'scoped memory for tpu_custom_call.1']
    #allocation7 [shape = 'u8[16384]{0}', space=vmem, size = 0x4000, scoped, tag = 'input window, operand 2, single buffered']
    #allocation8 [shape = 'u8[12288]{0}', space=vmem, size = 0x3000, scoped, tag = 'input window, operand 3, single buffered']
    #allocation9 [shape = 's32[1]{0}', space=sflag, size = 0x4, scoped, tag = 'scoped memory for tpu_custom_call.1']
    #allocation10 [shape = 'u8[16384]{0}', space=vmem, size = 0x4000, scoped, tag = 'input window, operand 4, single buffered']
    #allocation11 [shape = 'u8[36864]{0}', space=vmem, size = 0x9000, scoped, tag = 'input window, operand 5, single buffered']
    #allocation12 [shape = 's32[1]{0}', space=sflag, size = 0x4, scoped, tag = 'scoped memory for tpu_custom_call.1']
    #allocation13 [shape = 'u8[73728]{0}', space=vmem, size = 0x12000, scoped, tag = 'output window, operand 0']
    %11 = vsyncpa [#allocation3], 0
    %s12 = scalar_lea.sflag [#allocation3], 1
    %13 = vsyncpa %s12, 0
    %14 = vsyncpa [#allocation6], 0
    %15 = vsyncpa [#allocation9], 0
    %16 = vsyncpa [#allocation12], 0
    %17 = vsyncpa [#allocation4], 0
    %s18 = scalar_lea.sflag [#allocation4], 1
    %19 = vsyncpa %s18, 0
    loop: start=0, step=1, limit=4
    $region2: #{tpu_custom_call.1} parent=1 // loop_pre_header
      _
    $region3: #{tpu_custom_call.1} parent=1 // loop_header
      %s21 = sphi 0, %s25
      %p22 = scmp.ge.s32.totalorder %s21, 4
      %s28 = sphi 0, %s47
      %s29 = sphi 0, %s43
      %s30 = sphi 0, %s39
      %s31 = sphi 0, %s28
      %s32 = sphi 0, %s29
      %s33 = sphi 0, %s30
      %s34 = sphi 0, %s31
      %s35 = sphi 0, %s32
      %s36 = sphi 0, %s33
      %s54 = sphi 0, %s56
      %s57 = sphi 0, %s54
      %s58 = sphi 0, %s57
      %s74 = sphi 0, %s58
      %s78 = sphi 0, %s78
      %s80 = sphi 0, %s78
      %s81 = sphi 0, %s80
      %s95 = sphi 0, %s81
      %s99 = sphi 0, %s99
      %s101 = sphi 0, %s99
      %s102 = sphi 0, %s101
      %s116 = sphi 0, %s102
      %s120 = sphi 0, %s120
      %s122 = sphi 0, %s120
      %s123 = sphi 0, %s122
      %s137 = sphi 0, %s123
      %s141 = sphi 0, %s141
      %s143 = sphi 0, %s141
      %s144 = sphi 0, %s143
      %s158 = sphi 0, %s144
      %s162 = sphi 0, %s162
      %s164 = sphi 0, %s162
      %s165 = sphi 0, %s164
      %s179 = sphi 0, %s165
      %s189 = sphi 0, %s191
      %s192 = sphi 0, %s189
      %s193 = sphi 0, %s192
      %s209 = sphi 0, %s193
    $region4: #{tpu_custom_call.1} parent=1 // loop_header_branch
      %24 = sbr.rel (%p22) target = $region8
    $region5: #{tpu_custom_call.1} parent=1 // loop_body
      %s26 = ssub.s32 %s21, 1
      %s27 = ssub.s32 %s21, 2
      %s37 = sadd.s32 1, %s30
      %p38 = scmp.ge.s32.totalorder %s37, 1
      %s39 = scalar_select %p38, 0, %s37
      %s40 = sadd.s32 1, %s29
      %s41 = scalar_select %p38, %s40, %s29
      %p42 = scmp.ge.s32.totalorder %s41, 1
      %s43 = scalar_select %p42, 0, %s41
      %s44 = sadd.s32 1, %s28
      %s45 = scalar_select %p42, %s44, %s28
      %p46 = scmp.ge.s32.totalorder %s45, 2
      %s47 = scalar_select %p46, 0, %s45
      %s48 = ssub.s32 %s28, %s47
      %s49 = ssub.s32 %s29, %s43
      %s50 = sor.u32 %s48, %s49
      %s51 = ssub.s32 %s30, %s39
      %s52 = sor.u32 %s50, %s51
      %p53 = scmp.eq.s32.totalorder %s52, 0
      %s55 = sadd.s32 %s54, 1
      %s56 = scalar_select %p53, %s54, %s55
      %p59 = pneg %p53
      %p60 = scmp.eq.s32.totalorder %s21, 1
      %p61 = por %p59, %p60
      %p62 = scmp.ne.s32.totalorder %s54, %s57
      %p63 = scmp.eq.s32.totalorder %s21, 0
      %p64 = por %p62, %p63
      %p65 = scmp.ne.s32.totalorder %s54, %s57
      %p66 = scmp.eq.s32.totalorder %s26, 1
      %p67 = por %p65, %p66
      %p68 = scmp.ne.s32.totalorder %s57, %s58
      %p69 = scmp.eq.s32.totalorder %s26, 0
      %p70 = por %p68, %p69
      %p71 = scmp.ne.s32.totalorder %s57, %s58
      %p72 = scmp.eq.s32.totalorder %s27, 1
      %p73 = por %p71, %p72
      %p75 = scmp.ne.s32.totalorder %s58, %s74
      %p76 = scmp.eq.s32.totalorder %s27, 0
      %p77 = por %p75, %p76
      %s79 = sadd.s32 %s78, 1
      %p82 = scmp.eq.s32.totalorder %s21, 1
      %p83 = scmp.ne.s32.totalorder %s78, %s80
      %p84 = scmp.eq.s32.totalorder %s21, 0
      %p85 = por %p83, %p84
      %p86 = scmp.ne.s32.totalorder %s78, %s80
      %p87 = scmp.eq.s32.totalorder %s26, 1
      %p88 = por %p86, %p87
      %p89 = scmp.ne.s32.totalorder %s80, %s81
      %p90 = scmp.eq.s32.totalorder %s26, 0
      %p91 = por %p89, %p90
      %p92 = scmp.ne.s32.totalorder %s80, %s81
      %p93 = scmp.eq.s32.totalorder %s27, 1
      %p94 = por %p92, %p93
      %p96 = scmp.ne.s32.totalorder %s81, %s95
      %p97 = scmp.eq.s32.totalorder %s27, 0
      %p98 = por %p96, %p97
      %s100 = sadd.s32 %s99, 1
      %p103 = scmp.eq.s32.totalorder %s21, 1
      %p104 = scmp.ne.s32.totalorder %s99, %s101
      %p105 = scmp.eq.s32.totalorder %s21, 0
      %p106 = por %p104, %p105
      %p107 = scmp.ne.s32.totalorder %s99, %s101
      %p108 = scmp.eq.s32.totalorder %s26, 1
      %p109 = por %p107, %p108
      %p110 = scmp.ne.s32.totalorder %s101, %s102
      %p111 = scmp.eq.s32.totalorder %s26, 0
      %p112 = por %p110, %p111
      %p113 = scmp.ne.s32.totalorder %s101, %s102
      %p114 = scmp.eq.s32.totalorder %s27, 1
      %p115 = por %p113, %p114
      %p117 = scmp.ne.s32.totalorder %s102, %s116
      %p118 = scmp.eq.s32.totalorder %s27, 0
      %p119 = por %p117, %p118
      %s121 = sadd.s32 %s120, 1
      %p124 = scmp.eq.s32.totalorder %s21, 1
      %p125 = scmp.ne.s32.totalorder %s120, %s122
      %p126 = scmp.eq.s32.totalorder %s21, 0
      %p127 = por %p125, %p126
      %p128 = scmp.ne.s32.totalorder %s120, %s122
      %p129 = scmp.eq.s32.totalorder %s26, 1
      %p130 = por %p128, %p129
      %p131 = scmp.ne.s32.totalorder %s122, %s123
      %p132 = scmp.eq.s32.totalorder %s26, 0
      %p133 = por %p131, %p132
      %p134 = scmp.ne.s32.totalorder %s122, %s123
      %p135 = scmp.eq.s32.totalorder %s27, 1
      %p136 = por %p134, %p135
      %p138 = scmp.ne.s32.totalorder %s123, %s137
      %p139 = scmp.eq.s32.totalorder %s27, 0
      %p140 = por %p138, %p139
      %s142 = sadd.s32 %s141, 1
      %p145 = scmp.eq.s32.totalorder %s21, 1
      %p146 = scmp.ne.s32.totalorder %s141, %s143
      %p147 = scmp.eq.s32.totalorder %s21, 0
      %p148 = por %p146, %p147
      %p149 = scmp.ne.s32.totalorder %s141, %s143
      %p150 = scmp.eq.s32.totalorder %s26, 1
      %p151 = por %p149, %p150
      %p152 = scmp.ne.s32.totalorder %s143, %s144
      %p153 = scmp.eq.s32.totalorder %s26, 0
      %p154 = por %p152, %p153
      %p155 = scmp.ne.s32.totalorder %s143, %s144
      %p156 = scmp.eq.s32.totalorder %s27, 1
      %p157 = por %p155, %p156
      %p159 = scmp.ne.s32.totalorder %s144, %s158
      %p160 = scmp.eq.s32.totalorder %s27, 0
      %p161 = por %p159, %p160
      %s163 = sadd.s32 %s162, 1
      %p166 = scmp.eq.s32.totalorder %s21, 1
      %p167 = scmp.ne.s32.totalorder %s162, %s164
      %p168 = scmp.eq.s32.totalorder %s21, 0
      %p169 = por %p167, %p168
      %p170 = scmp.ne.s32.totalorder %s162, %s164
      %p171 = scmp.eq.s32.totalorder %s26, 1
      %p172 = por %p170, %p171
      %p173 = scmp.ne.s32.totalorder %s164, %s165
      %p174 = scmp.eq.s32.totalorder %s26, 0
      %p175 = por %p173, %p174
      %p176 = scmp.ne.s32.totalorder %s164, %s165
      %p177 = scmp.eq.s32.totalorder %s27, 1
      %p178 = por %p176, %p177
      %p180 = scmp.ne.s32.totalorder %s165, %s179
      %p181 = scmp.eq.s32.totalorder %s27, 0
      %p182 = por %p180, %p181
      %s183 = ssub.s32 %s28, %s47
      %s184 = ssub.s32 %s29, %s43
      %s185 = sor.u32 %s183, %s184
      %s186 = ssub.s32 %s30, %s39
      %s187 = sor.u32 %s185, %s186
      %p188 = scmp.eq.s32.totalorder %s187, 0
      %s190 = sadd.s32 %s189, 1
      %s191 = scalar_select %p188, %s189, %s190
      %p194 = pneg %p188
      %p195 = scmp.eq.s32.totalorder %s21, 1
      %p196 = por %p194, %p195
      %p197 = scmp.ne.s32.totalorder %s189, %s192
      %p198 = scmp.eq.s32.totalorder %s21, 0
      %p199 = por %p197, %p198
      %p200 = scmp.ne.s32.totalorder %s189, %s192
      %p201 = scmp.eq.s32.totalorder %s26, 1
      %p202 = por %p200, %p201
      %p203 = scmp.ne.s32.totalorder %s192, %s193
      %p204 = scmp.eq.s32.totalorder %s26, 0
      %p205 = por %p203, %p204
      %p206 = scmp.ne.s32.totalorder %s192, %s193
      %p207 = scmp.eq.s32.totalorder %s27, 1
      %p208 = por %p206, %p207
      %p210 = scmp.ne.s32.totalorder %s193, %s209
      %p211 = scmp.eq.s32.totalorder %s27, 0
      %p212 = por %p210, %p211
      %p213 = scmp.le.s32.totalorder 1, %s21
      %p214 = scmp.lt.s32.totalorder %s21, 3
      %p215 = pnand %p213, %p214
      %p216 = pneg %p215
      // Predicated region
      $region9: #{tpu_custom_call.1} parent=5 // pred_check
        _
      $region10: #{tpu_custom_call.1} parent=5 // pred_check_branch
        %218 = sbr.rel (%p215) target = $region12
      $region11: #{tpu_custom_call.1} parent=5 // pred_region
        %s219 = ssub.s32 %s21, 1
        // Predicated region
        $region13: #{tpu_custom_call.1} parent=11 // pred_check
          %p220 = pneg %p91
        $region14: #{tpu_custom_call.1} parent=11 // pred_check_branch
          %222 = sbr.rel (%p220) target = $region16
        $region15: #{tpu_custom_call.1} parent=11 // pred_region
          %s224 = ssub.s32 384, 384
          %225 = vsyncadd [#allocation6], %s224
          %s226 = sshll.u32 [#allocation5], 4
          %s227 = int_to_ptr.vmem [resolvable:$true] %s226
          %232 = dma.hbm_to_vmem [thread:$0]  %s1, 384, %s227, [#allocation6], 128, 128, 8
        $region16: #{tpu_custom_call.1} parent=11 // pred_fallthru
          _
        // Predicated region
        $region17: #{tpu_custom_call.1} parent=11 // pred_check
          %p233 = pneg %p112
        $region18: #{tpu_custom_call.1} parent=11 // pred_check_branch
          %235 = sbr.rel (%p233) target = $region20
        $region19: #{tpu_custom_call.1} parent=11 // pred_region
          %s237 = ssub.s32 512, 512
          %238 = vsyncadd [#allocation6], %s237
          %s239 = sshll.u32 [#allocation7], 4
          %s240 = int_to_ptr.vmem [resolvable:$true] %s239
          %245 = dma.hbm_to_vmem [thread:$0]  %s2, 512, %s240, [#allocation6], 128, 128, 8
        $region20: #{tpu_custom_call.1} parent=11 // pred_fallthru
          _
        // Predicated region
        $region21: #{tpu_custom_call.1} parent=11 // pred_check
          %p246 = pneg %p133
        $region22: #{tpu_custom_call.1} parent=11 // pred_check_branch
          %248 = sbr.rel (%p246) target = $region24
        $region23: #{tpu_custom_call.1} parent=11 // pred_region
          %s250 = ssub.s32 384, 384
          %251 = vsyncadd [#allocation9], %s250
          %s252 = sshll.u32 [#allocation8], 4
          %s253 = int_to_ptr.vmem [resolvable:$true] %s252
          %258 = dma.hbm_to_vmem [thread:$0]  %s3, 384, %s253, [#allocation9], 128, 128, 8
        $region24: #{tpu_custom_call.1} parent=11 // pred_fallthru
          _
        // Predicated region
        $region25: #{tpu_custom_call.1} parent=11 // pred_check
          %p259 = pneg %p154
        $region26: #{tpu_custom_call.1} parent=11 // pred_check_branch
          %261 = sbr.rel (%p259) target = $region28
        $region27: #{tpu_custom_call.1} parent=11 // pred_region
          %s263 = ssub.s32 512, 512
          %264 = vsyncadd [#allocation9], %s263
          %s265 = sshll.u32 [#allocation10], 4
          %s266 = int_to_ptr.vmem [resolvable:$true] %s265
          %271 = dma.hbm_to_vmem [thread:$0]  %s4, 512, %s266, [#allocation9], 128, 128, 8
        $region28: #{tpu_custom_call.1} parent=11 // pred_fallthru
          _
        // Predicated region
        $region29: #{tpu_custom_call.1} parent=11 // pred_check
          %p272 = pneg %p175
        $region30: #{tpu_custom_call.1} parent=11 // pred_check_branch
          %274 = sbr.rel (%p272) target = $region32
        $region31: #{tpu_custom_call.1} parent=11 // pred_region
          %s276 = ssub.s32 1152, 1152
          %277 = vsyncadd [#allocation12], %s276
          %s278 = sshll.u32 [#allocation11], 4
          %s279 = int_to_ptr.vmem [resolvable:$true] %s278
          %284 = dma.hbm_to_vmem [thread:$0]  %s5, 1152, %s279, [#allocation12], 128, 128, 8
        $region32: #{tpu_custom_call.1} parent=11 // pred_fallthru
          _
      $region12: #{tpu_custom_call.1} parent=5 // pred_fallthru
        _
      %p285 = scmp.lt.s32.totalorder %s21, 2
      // Predicated region
      $region33: #{tpu_custom_call.1} parent=5 // pred_check
        %p286 = pneg %p285
      $region34: #{tpu_custom_call.1} parent=5 // pred_check_branch
        %288 = sbr.rel (%p286) target = $region36
      $region35: #{tpu_custom_call.1} parent=5 // pred_region
        // Predicated region
        $region37: #{tpu_custom_call.1} parent=35 // pred_check
          %p289 = pneg %p64
        $region38: #{tpu_custom_call.1} parent=35 // pred_check_branch
          %291 = sbr.rel (%p289) target = $region40
        $region39: #{tpu_custom_call.1} parent=35 // pred_region
          %s292 = sand.u32 %s54, 1
          %s293 = scalar_lea.sflag [#allocation3], %s292
          %s294 = sand.u32 %s54, 1
          %s295 = smul.addr %s294, 72
          %s296 = scalar_lea.vmem [#allocation2], %s295
          %s297 = smul.u32 3, %s29
          %s299 = ssub.s32 1152, 1152
          %300 = vsyncadd %s293, %s299
          %s301 = sadd.s32 %s30, %s297
          %s302 = smul.addr %s28, 9
          %s303 = sadd.s32 %s301, %s302
          %s304 = smul.addr %s303, 128
          %s305 = scalar_lea.hbm %s0, %s304
          %s306 = sshll.u32 %s296, 4
          %s307 = int_to_ptr.vmem [resolvable:$true] %s306
          %312 = dma.hbm_to_vmem [thread:$0]  %s305, 1152, %s307, %s293, 128, 128, 8
        $region40: #{tpu_custom_call.1} parent=35 // pred_fallthru
          _
      $region36: #{tpu_custom_call.1} parent=5 // pred_fallthru
        _
      %p313 = scmp.le.s32.totalorder 1, %s21
      %p314 = scmp.lt.s32.totalorder %s21, 3
      %p315 = pnand %p313, %p314
      %p316 = pneg %p315
      // Predicated region
      $region41: #{tpu_custom_call.1} parent=5 // pred_check
        _
      $region42: #{tpu_custom_call.1} parent=5 // pred_check_branch
        %318 = sbr.rel (%p315) target = $region44
      $region43: #{tpu_custom_call.1} parent=5 // pred_region
        %s319 = ssub.s32 %s21, 1
        %s320 = sand.u32 %s57, 1
        %s321 = scalar_lea.sflag [#allocation3], %s320
        %s322 = sand.u32 %s57, 1
        %s323 = smul.addr %s322, 72
        %s324 = scalar_lea.vmem [#allocation2], %s323
        // Predicated region
        $region45: #{tpu_custom_call.1} parent=43 // pred_check
          %p325 = pneg %p70
        $region46: #{tpu_custom_call.1} parent=43 // pred_check_branch
          %327 = sbr.rel (%p325) target = $region48
        $region47: #{tpu_custom_call.1} parent=43 // pred_region
          %328 = dma.done %s321, 1152
        $region48: #{tpu_custom_call.1} parent=43 // pred_fallthru
          _
        // Predicated region
        $region49: #{tpu_custom_call.1} parent=43 // pred_check
          %p329 = pneg %p91
        $region50: #{tpu_custom_call.1} parent=43 // pred_check_branch
          %331 = sbr.rel (%p329) target = $region52
        $region51: #{tpu_custom_call.1} parent=43 // pred_region
          %332 = dma.done [#allocation6], 384
        $region52: #{tpu_custom_call.1} parent=43 // pred_fallthru
          _
        // Predicated region
        $region53: #{tpu_custom_call.1} parent=43 // pred_check
          %p333 = pneg %p112
        $region54: #{tpu_custom_call.1} parent=43 // pred_check_branch
          %335 = sbr.rel (%p333) target = $region56
        $region55: #{tpu_custom_call.1} parent=43 // pred_region
          %336 = dma.done [#allocation6], 512
        $region56: #{tpu_custom_call.1} parent=43 // pred_fallthru
          _
        // Predicated region
        $region57: #{tpu_custom_call.1} parent=43 // pred_check
          %p337 = pneg %p133
        $region58: #{tpu_custom_call.1} parent=43 // pred_check_branch
          %339 = sbr.rel (%p337) target = $region60
        $region59: #{tpu_custom_call.1} parent=43 // pred_region
          %340 = dma.done [#allocation9], 384
        $region60: #{tpu_custom_call.1} parent=43 // pred_fallthru
          _
        // Predicated region
        $region61: #{tpu_custom_call.1} parent=43 // pred_check
          %p341 = pneg %p154
        $region62: #{tpu_custom_call.1} parent=43 // pred_check_branch
          %343 = sbr.rel (%p341) target = $region64
        $region63: #{tpu_custom_call.1} parent=43 // pred_region
          %344 = dma.done [#allocation9], 512
        $region64: #{tpu_custom_call.1} parent=43 // pred_fallthru
          _
        // Predicated region
        $region65: #{tpu_custom_call.1} parent=43 // pred_check
          %p345 = pneg %p175
        $region66: #{tpu_custom_call.1} parent=43 // pred_check_branch
          %347 = sbr.rel (%p345) target = $region68
        $region67: #{tpu_custom_call.1} parent=43 // pred_region
          %348 = dma.done [#allocation12], 1152
        $region68: #{tpu_custom_call.1} parent=43 // pred_fallthru
          _
        %s349 = sand.u32 %s57, 1
        %s350 = scalar_lea.sflag [#allocation3], %s349
        %s351 = sand.u32 %s57, 1
        %s352 = smul.addr %s351, 72
        %s353 = scalar_lea.vmem [#allocation2], %s352
        %p354 = pneg %p70
        %p355 = pneg %p67
        %p356 = pneg %p91
        %p357 = pneg %p88
        %p358 = pneg %p112
        %p359 = pneg %p109
        %p360 = pneg %p133
        %p361 = pneg %p130
        %p362 = pneg %p154
        %p363 = pneg %p151
        %p364 = pneg %p175
        %p365 = pneg %p172
        %p366 = pneg %p205
        %p367 = pneg %p202
        %s368 = sand.u32 %s192, 1
        %s369 = scalar_lea.sflag [#allocation4], %s368
        %s370 = sand.u32 %s192, 1
        %s371 = smul.addr %s370, 72
        %s372 = scalar_lea.vmem [#allocation13], %s371
        %s373 = smul.u32 3, %s32
        %s374 = smul.u32 3, %s32
        %v375 = vld [vmem:[%s324] sm:$0xff]
        %v376 = vld [vmem:[%s324 + $0x8] sm:$0xff]
        %v377 = vld [vmem:[%s324 + $0x10] sm:$0xff]
        %s378 = scalar_lea.vmem %s324, 24 [#allocation2]
        %v379 = vld [vmem:[%s378] sm:$0xff]
        %v380 = vld [vmem:[%s378 + $0x8] sm:$0xff]
        %v381 = vld [vmem:[%s378 + $0x10] sm:$0xff]
        %s382 = scalar_lea.vmem %s324, 48 [#allocation2]
        %v383 = vld [vmem:[%s382] sm:$0xff]
        %v384 = vld [vmem:[%s382 + $0x8] sm:$0xff]
        %v385 = vld [vmem:[%s382 + $0x10] sm:$0xff]
        %v386 = vmul.f32 %v375, 0.299
        %v387 = vmul.f32 %v376, 0.299
        %v388 = vmul.f32 %v377, 0.299
        %v389 = vmul.f32 %v379, 0.587
        %v390 = vmul.f32 %v380, 0.587
        %v391 = vmul.f32 %v381, 0.587
        %v392 = vadd.f32 %v386, %v389
        %v393 = vadd.f32 %v387, %v390
        %v394 = vadd.f32 %v388, %v391
        %v395 = vmul.f32 %v383, 0.114
        %v396 = vmul.f32 %v384, 0.114
        %v397 = vmul.f32 %v385, 0.114
        %v398 = vadd.f32 %v392, %v395
        %v399 = vadd.f32 %v393, %v396
        %v400 = vadd.f32 %v394, %v397
        %v401 = vmul.f32 %v375, -0.14713
        %v402 = vmul.f32 %v376, -0.14713
        %v403 = vmul.f32 %v377, -0.14713
        %v404 = vmul.f32 %v379, -0.28886
        %v405 = vmul.f32 %v380, -0.28886
        %v406 = vmul.f32 %v381, -0.28886
        %v407 = vadd.f32 %v401, %v404
        %v408 = vadd.f32 %v402, %v405
        %v409 = vadd.f32 %v403, %v406
        %v410 = vmul.f32 %v383, 0.436
        %v411 = vmul.f32 %v384, 0.436
        %v412 = vmul.f32 %v385, 0.436
        %v413 = vadd.f32 %v407, %v410
        %v414 = vadd.f32 %v408, %v411
        %v415 = vadd.f32 %v409, %v412
        %v416 = vmul.f32 %v375, 0.615
        %v417 = vmul.f32 %v376, 0.615
        %v418 = vmul.f32 %v377, 0.615
        %v419 = vmul.f32 %v379, -0.51499
        %v420 = vmul.f32 %v380, -0.51499
        %v421 = vmul.f32 %v381, -0.51499
        %v422 = vadd.f32 %v416, %v419
        %v423 = vadd.f32 %v417, %v420
        %v424 = vadd.f32 %v418, %v421
        %v425 = vmul.f32 %v383, -0.10001
        %v426 = vmul.f32 %v384, -0.10001
        %v427 = vmul.f32 %v385, -0.10001
        %v428 = vadd.f32 %v422, %v425
        %v429 = vadd.f32 %v423, %v426
        %v430 = vadd.f32 %v424, %v427
        %v431 = vld [vmem:[#allocation5] sm:$0xff]
        %v432 = vld [vmem:[#allocation5 + $0x8] sm:$0xff]
        %v433 = vld [vmem:[#allocation5 + $0x10] sm:$0xff]
        %v434 = vld [vmem:[#allocation7] sm:$0xff]
        %v435 = vld [vmem:[#allocation7 + $0x8] sm:$0xff]
        %v436 = vld [vmem:[#allocation7 + $0x10] sm:$0xff]
        %v437 = vld [vmem:[#allocation7 + $0x18] sm:$0xff]
        %v438 = vld [vmem:[#allocation8] sm:$0xff]
        %v439 = vld [vmem:[#allocation8 + $0x8] sm:$0xff]
        %v440 = vld [vmem:[#allocation8 + $0x10] sm:$0xff]
        %v441 = vld [vmem:[#allocation10] sm:$0xff]
        %v442 = vld [vmem:[#allocation10 + $0x8] sm:$0xff]
        %v443 = vld [vmem:[#allocation10 + $0x10] sm:$0xff]
        %v444 = vld [vmem:[#allocation10 + $0x18] sm:$0xff]
        %vm445 = vcmask 261120
        %v447 = vsel %vm445, %v398, 0
        %v450 = vsel %vm445, %v399, 0
        %v453 = vsel %vm445, %v400, 0
        %v456 = vsel %vm445, %v413, 0
        %v459 = vsel %vm445, %v414, 0
        %v462 = vsel %vm445, %v415, 0
        %v465 = vsel %vm445, %v428, 0
        %v468 = vsel %vm445, %v429, 0
        %v471 = vsel %vm445, %v430, 0
        %473 = vmatprep.subr.mxu0 0.0
        %474 = vmatpush1.msra.mxu0 0.0
        %475 = vmatprep.subr.mxu0 0.0
        %476 = vmatpush1.msra.mxu0 0.0
        %477 = vmatprep.subr.mxu0 0.0
        %478 = vmatpush1.msra.mxu0 0.0
        %479 = vmatprep.subr.mxu0 0.0
        %480 = vmatpush1.msra.mxu0 0.0
        %481 = vmatprep.subr.mxu0 0.0
        %482 = vmatpush1.msra.mxu0 0.0
        %483 = vmatprep.subr.mxu0 0.0
        %484 = vmatpush1.msra.mxu0 0.0
        %485 = vmatprep.subr.mxu0 0.0
        %486 = vmatpush1.msra.mxu0 0.0
        %487 = vmatprep.subr.mxu0 0.0
        %488 = vmatpush1.msra.mxu0 0.0
        %489 = vmatprep.subr.mxu0 0.0
        %490 = vmatpush1.msra.mxu0 0.0
        %491 = vmatprep.subr.mxu0 0.0
        %492 = vmatpush1.msra.mxu0 0.0
        %493 = vmatprep.subr.mxu0 0.0
        %494 = vmatpush1.msra.mxu0 0.0
        %495 = vmatprep.subr.mxu0 0.0
        %496 = vmatpush1.msra.mxu0 0.0
        %497 = vmatprep.subr.mxu0 0.0
        %498 = vmatpush1.msra.mxu0 %v437
        %499 = vmatprep.subr.mxu0 0.0
        %500 = vmatpush1.msra.mxu0 %v436
        %501 = vmatprep.subr.mxu0 0.0
        %502 = vmatpush1.msra.mxu0 %v435
        %503 = vmatprep.subr.mxu0 0.0
        %504 = vmatpush1.msra.mxu0 %v434
        %505 = vmatprep.subr.mxu0 0.0
        %506 = vmatpush2.msra.mxu0 0.0
        %507 = vmatprep.subr.mxu0 0.0
        %508 = vmatpush2.msra.mxu0 0.0
        %509 = vmatprep.subr.mxu0 0.0
        %510 = vmatpush2.msra.mxu0 0.0
        %511 = vmatprep.subr.mxu0 0.0
        %512 = vmatpush2.msra.mxu0 0.0
        %513 = vmatprep.subr.mxu0 0.0
        %514 = vmatpush2.msra.mxu0 0.0
        %515 = vmatprep.subr.mxu0 0.0
        %516 = vmatpush2.msra.mxu0 0.0
        %517 = vmatprep.subr.mxu0 0.0
        %518 = vmatpush2.msra.mxu0 0.0
        %519 = vmatprep.subr.mxu0 0.0
        %520 = vmatpush2.msra.mxu0 0.0
        %521 = vmatprep.subr.mxu0 0.0
        %522 = vmatpush2.msra.mxu0 0.0
        %523 = vmatprep.subr.mxu0 0.0
        %524 = vmatpush2.msra.mxu0 0.0
        %525 = vmatprep.subr.mxu0 0.0
        %526 = vmatpush2.msra.mxu0 0.0
        %527 = vmatprep.subr.mxu0 0.0
        %528 = vmatpush2.msra.mxu0 0.0
        %529 = vmatprep.subr.mxu0 0.0
        %530 = vmatpush2.msra.mxu0 0.0
        %531 = vmatprep.subr.mxu0 0.0
        %532 = vmatpush2.msra.mxu0 0.0
        %533 = vmatprep.subr.mxu0 0.0
        %534 = vmatpush2.msra.mxu0 0.0
        %535 = vmatprep.subr.mxu0 0.0
        %536 = vmatpush2.msra.mxu0 0.0
        %537 = vmatprep.mubr.f32.mxu0 0.0
        %538 = vmatmul.mubr.f32.gmra.mxu0 %v447
        %v539 = vpop.f32.mrf.mxu0
        %v540 = vadd.f32 0.0, %v539
        %v541 = vpop.f32.mrf.mxu0
        %542 = vmatprep.mubr.f32.mxu0 0.0
        %543 = vmatmul.mubr.f32.gmra.mxu0 %v450
        %v544 = vpop.f32.mrf.mxu0
        %v545 = vadd.f32 0.0, %v544
        %v546 = vpop.f32.mrf.mxu0
        %547 = vmatprep.mubr.f32.mxu0 0.0
        %548 = vmatmul.mubr.f32.gmra.mxu0 %v453
        %v549 = vpop.f32.mrf.mxu0
        %v550 = vadd.f32 0.0, %v549
        %v551 = vpop.f32.mrf.mxu0
        %552 = vmatprep.mubr.f32.mxu0 0.0
        %553 = vmatmul.mubr.f32.gmra.mxu0 %v456
        %v554 = vpop.f32.mrf.mxu0
        %v555 = vadd.f32 0.0, %v554
        %v556 = vpop.f32.mrf.mxu0
        %557 = vmatprep.mubr.f32.mxu0 0.0
        %558 = vmatmul.mubr.f32.gmra.mxu0 %v459
        %v559 = vpop.f32.mrf.mxu0
        %v560 = vadd.f32 0.0, %v559
        %v561 = vpop.f32.mrf.mxu0
        %562 = vmatprep.mubr.f32.mxu0 0.0
        %563 = vmatmul.mubr.f32.gmra.mxu0 %v462
        %v564 = vpop.f32.mrf.mxu0
        %v565 = vadd.f32 0.0, %v564
        %v566 = vpop.f32.mrf.mxu0
        %567 = vmatprep.mubr.f32.mxu0 0.0
        %568 = vmatmul.mubr.f32.gmra.mxu0 %v465
        %v569 = vpop.f32.mrf.mxu0
        %v570 = vadd.f32 0.0, %v569
        %v571 = vpop.f32.mrf.mxu0
        %572 = vmatprep.mubr.f32.mxu0 0.0
        %573 = vmatmul.mubr.f32.gmra.mxu0 %v468
        %v574 = vpop.f32.mrf.mxu0
        %v575 = vadd.f32 0.0, %v574
        %v576 = vpop.f32.mrf.mxu0
        %577 = vmatprep.mubr.f32.mxu0 0.0
        %578 = vmatmul.mubr.f32.gmra.mxu0 %v471
        %v579 = vpop.f32.mrf.mxu0
        %v580 = vadd.f32 0.0, %v579
        %v581 = vpop.f32.mrf.mxu0
        %582 = vdwg.mxu0
        %vm583 = vcmask 195584
        %v585 = vsel %vm583, %v431, 0
        %v588 = vsel %vm583, %v432, 0
        %v591 = vsel %vm583, %v433, 0
        %593 = vmatprep.subr.mxu0 0.0
        %594 = vmatpush1.msra.mxu0 0.0
        %595 = vmatprep.subr.mxu0 0.0
        %596 = vmatpush1.msra.mxu0 0.0
        %597 = vmatprep.subr.mxu0 0.0
        %598 = vmatpush1.msra.mxu0 0.0
        %599 = vmatprep.subr.mxu0 0.0
        %600 = vmatpush1.msra.mxu0 0.0
        %601 = vmatprep.subr.mxu0 0.0
        %602 = vmatpush1.msra.mxu0 0.0
        %603 = vmatprep.subr.mxu0 0.0
        %604 = vmatpush1.msra.mxu0 0.0
        %605 = vmatprep.subr.mxu0 0.0
        %606 = vmatpush1.msra.mxu0 0.0
        %607 = vmatprep.subr.mxu0 0.0
        %608 = vmatpush1.msra.mxu0 0.0
        %609 = vmatprep.subr.mxu0 0.0
        %610 = vmatpush1.msra.mxu0 0.0
        %611 = vmatprep.subr.mxu0 0.0
        %612 = vmatpush1.msra.mxu0 0.0
        %613 = vmatprep.subr.mxu0 0.0
        %614 = vmatpush1.msra.mxu0 0.0
        %615 = vmatprep.subr.mxu0 0.0
        %616 = vmatpush1.msra.mxu0 0.0
        %617 = vmatprep.subr.mxu0 0.0
        %618 = vmatpush1.msra.mxu0 0.0
        %619 = vmatprep.subr.mxu0 0.0
        %620 = vmatpush1.msra.mxu0 %v550
        %621 = vmatprep.subr.mxu0 0.0
        %622 = vmatpush1.msra.mxu0 %v545
        %623 = vmatprep.subr.mxu0 0.0
        %624 = vmatpush1.msra.mxu0 %v540
        %625 = vmatprep.subr.mxu0 0.0
        %626 = vmatpush2.msra.mxu0 0.0
        %627 = vmatprep.subr.mxu0 0.0
        %628 = vmatpush2.msra.mxu0 0.0
        %629 = vmatprep.subr.mxu0 0.0
        %630 = vmatpush2.msra.mxu0 0.0
        %631 = vmatprep.subr.mxu0 0.0
        %632 = vmatpush2.msra.mxu0 0.0
        %633 = vmatprep.subr.mxu0 0.0
        %634 = vmatpush2.msra.mxu0 0.0
        %635 = vmatprep.subr.mxu0 0.0
        %636 = vmatpush2.msra.mxu0 0.0
        %637 = vmatprep.subr.mxu0 0.0
        %638 = vmatpush2.msra.mxu0 0.0
        %639 = vmatprep.subr.mxu0 0.0
        %640 = vmatpush2.msra.mxu0 0.0
        %641 = vmatprep.subr.mxu0 0.0
        %642 = vmatpush2.msra.mxu0 0.0
        %643 = vmatprep.subr.mxu0 0.0
        %644 = vmatpush2.msra.mxu0 0.0
        %645 = vmatprep.subr.mxu0 0.0
        %646 = vmatpush2.msra.mxu0 0.0
        %647 = vmatprep.subr.mxu0 0.0
        %648 = vmatpush2.msra.mxu0 0.0
        %649 = vmatprep.subr.mxu0 0.0
        %650 = vmatpush2.msra.mxu0 0.0
        %651 = vmatprep.subr.mxu0 0.0
        %652 = vmatpush2.msra.mxu0 0.0
        %653 = vmatprep.subr.mxu0 0.0
        %654 = vmatpush2.msra.mxu0 0.0
        %655 = vmatprep.subr.mxu0 0.0
        %656 = vmatpush2.msra.mxu0 0.0
        %657 = vmatprep.mubr.f32.mxu0 0.0
        %658 = vmatmul.mubr.f32.gmra.mxu0 %v585
        %v659 = vpop.f32.mrf.mxu0
        %v660 = vadd.f32 0.0, %v659
        %v661 = vpop.f32.mrf.mxu0
        %662 = vmatprep.mubr.f32.mxu0 0.0
        %663 = vmatmul.mubr.f32.gmra.mxu0 %v588
        %v664 = vpop.f32.mrf.mxu0
        %v665 = vadd.f32 0.0, %v664
        %v666 = vpop.f32.mrf.mxu0
        %667 = vmatprep.mubr.f32.mxu0 0.0
        %668 = vmatmul.mubr.f32.gmra.mxu0 %v591
        %v669 = vpop.f32.mrf.mxu0
        %v670 = vadd.f32 0.0, %v669
        %v671 = vpop.f32.mrf.mxu0
        %672 = vdwg.mxu0
        %v673 = vld [vmem:[#allocation11] sm:$0xff]
        %v674 = vld [vmem:[#allocation11 + $0x8] sm:$0xff]
        %v675 = vld [vmem:[#allocation11 + $0x10] sm:$0xff]
        %v676 = vmul.f32 %v660, %v673
        %v677 = vmul.f32 %v665, %v674
        %v678 = vmul.f32 %v670, %v675
        %v680 = vsel %vm583, %v438, 0
        %v683 = vsel %vm583, %v439, 0
        %v686 = vsel %vm583, %v440, 0
        %688 = vmatprep.subr.mxu0 0.0
        %689 = vmatpush1.msra.mxu0 0.0
        %690 = vmatprep.subr.mxu0 0.0
        %691 = vmatpush1.msra.mxu0 0.0
        %692 = vmatprep.subr.mxu0 0.0
        %693 = vmatpush1.msra.mxu0 0.0
        %694 = vmatprep.subr.mxu0 0.0
        %695 = vmatpush1.msra.mxu0 0.0
        %696 = vmatprep.subr.mxu0 0.0
        %697 = vmatpush1.msra.mxu0 0.0
        %698 = vmatprep.subr.mxu0 0.0
        %699 = vmatpush1.msra.mxu0 0.0
        %700 = vmatprep.subr.mxu0 0.0
        %701 = vmatpush1.msra.mxu0 0.0
        %702 = vmatprep.subr.mxu0 0.0
        %703 = vmatpush1.msra.mxu0 0.0
        %704 = vmatprep.subr.mxu0 0.0
        %705 = vmatpush1.msra.mxu0 0.0
        %706 = vmatprep.subr.mxu0 0.0
        %707 = vmatpush1.msra.mxu0 0.0
        %708 = vmatprep.subr.mxu0 0.0
        %709 = vmatpush1.msra.mxu0 0.0
        %710 = vmatprep.subr.mxu0 0.0
        %711 = vmatpush1.msra.mxu0 0.0
        %712 = vmatprep.subr.mxu0 0.0
        %713 = vmatpush1.msra.mxu0 0.0
        %714 = vmatprep.subr.mxu0 0.0
        %715 = vmatpush1.msra.mxu0 %v678
        %716 = vmatprep.subr.mxu0 0.0
        %717 = vmatpush1.msra.mxu0 %v677
        %718 = vmatprep.subr.mxu0 0.0
        %719 = vmatpush1.msra.mxu0 %v676
        %720 = vmatprep.subr.mxu0 0.0
        %721 = vmatpush2.msra.mxu0 0.0
        %722 = vmatprep.subr.mxu0 0.0
        %723 = vmatpush2.msra.mxu0 0.0
        %724 = vmatprep.subr.mxu0 0.0
        %725 = vmatpush2.msra.mxu0 0.0
        %726 = vmatprep.subr.mxu0 0.0
        %727 = vmatpush2.msra.mxu0 0.0
        %728 = vmatprep.subr.mxu0 0.0
        %729 = vmatpush2.msra.mxu0 0.0
        %730 = vmatprep.subr.mxu0 0.0
        %731 = vmatpush2.msra.mxu0 0.0
        %732 = vmatprep.subr.mxu0 0.0
        %733 = vmatpush2.msra.mxu0 0.0
        %734 = vmatprep.subr.mxu0 0.0
        %735 = vmatpush2.msra.mxu0 0.0
        %736 = vmatprep.subr.mxu0 0.0
        %737 = vmatpush2.msra.mxu0 0.0
        %738 = vmatprep.subr.mxu0 0.0
        %739 = vmatpush2.msra.mxu0 0.0
        %740 = vmatprep.subr.mxu0 0.0
        %741 = vmatpush2.msra.mxu0 0.0
        %742 = vmatprep.subr.mxu0 0.0
        %743 = vmatpush2.msra.mxu0 0.0
        %744 = vmatprep.subr.mxu0 0.0
        %745 = vmatpush2.msra.mxu0 0.0
        %746 = vmatprep.subr.mxu0 0.0
        %747 = vmatpush2.msra.mxu0 0.0
        %748 = vmatprep.subr.mxu0 0.0
        %749 = vmatpush2.msra.mxu0 0.0
        %750 = vmatprep.subr.mxu0 0.0
        %751 = vmatpush2.msra.mxu0 0.0
        %752 = vmatprep.mubr.f32.mxu0 0.0
        %753 = vmatmul.mubr.f32.gmra.mxu0 %v680
        %v754 = vpop.f32.mrf.mxu0
        %v755 = vadd.f32 0.0, %v754
        %v756 = vpop.f32.mrf.mxu0
        %757 = vmatprep.mubr.f32.mxu0 0.0
        %758 = vmatmul.mubr.f32.gmra.mxu0 %v683
        %v759 = vpop.f32.mrf.mxu0
        %v760 = vadd.f32 0.0, %v759
        %v761 = vpop.f32.mrf.mxu0
        %762 = vmatprep.mubr.f32.mxu0 0.0
        %763 = vmatmul.mubr.f32.gmra.mxu0 %v686
        %v764 = vpop.f32.mrf.mxu0
        %v765 = vadd.f32 0.0, %v764
        %v766 = vpop.f32.mrf.mxu0
        %767 = vdwg.mxu0
        %768 = vmatprep.subr.mxu0 0.0
        %769 = vmatpush1.msra.mxu0 0.0
        %770 = vmatprep.subr.mxu0 0.0
        %771 = vmatpush1.msra.mxu0 0.0
        %772 = vmatprep.subr.mxu0 0.0
        %773 = vmatpush1.msra.mxu0 0.0
        %774 = vmatprep.subr.mxu0 0.0
        %775 = vmatpush1.msra.mxu0 0.0
        %776 = vmatprep.subr.mxu0 0.0
        %777 = vmatpush1.msra.mxu0 0.0
        %778 = vmatprep.subr.mxu0 0.0
        %779 = vmatpush1.msra.mxu0 0.0
        %780 = vmatprep.subr.mxu0 0.0
        %781 = vmatpush1.msra.mxu0 0.0
        %782 = vmatprep.subr.mxu0 0.0
        %783 = vmatpush1.msra.mxu0 0.0
        %784 = vmatprep.subr.mxu0 0.0
        %785 = vmatpush1.msra.mxu0 0.0
        %786 = vmatprep.subr.mxu0 0.0
        %787 = vmatpush1.msra.mxu0 0.0
        %788 = vmatprep.subr.mxu0 0.0
        %789 = vmatpush1.msra.mxu0 0.0
        %790 = vmatprep.subr.mxu0 0.0
        %791 = vmatpush1.msra.mxu0 0.0
        %792 = vmatprep.subr.mxu0 0.0
        %793 = vmatpush1.msra.mxu0 0.0
        %794 = vmatprep.subr.mxu0 0.0
        %795 = vmatpush1.msra.mxu0 %v565
        %796 = vmatprep.subr.mxu0 0.0
        %797 = vmatpush1.msra.mxu0 %v560
        %798 = vmatprep.subr.mxu0 0.0
        %799 = vmatpush1.msra.mxu0 %v555
        %800 = vmatprep.subr.mxu0 0.0
        %801 = vmatpush2.msra.mxu0 0.0
        %802 = vmatprep.subr.mxu0 0.0
        %803 = vmatpush2.msra.mxu0 0.0
        %804 = vmatprep.subr.mxu0 0.0
        %805 = vmatpush2.msra.mxu0 0.0
        %806 = vmatprep.subr.mxu0 0.0
        %807 = vmatpush2.msra.mxu0 0.0
        %808 = vmatprep.subr.mxu0 0.0
        %809 = vmatpush2.msra.mxu0 0.0
        %810 = vmatprep.subr.mxu0 0.0
        %811 = vmatpush2.msra.mxu0 0.0
        %812 = vmatprep.subr.mxu0 0.0
        %813 = vmatpush2.msra.mxu0 0.0
        %814 = vmatprep.subr.mxu0 0.0
        %815 = vmatpush2.msra.mxu0 0.0
        %816 = vmatprep.subr.mxu0 0.0
        %817 = vmatpush2.msra.mxu0 0.0
        %818 = vmatprep.subr.mxu0 0.0
        %819 = vmatpush2.msra.mxu0 0.0
        %820 = vmatprep.subr.mxu0 0.0
        %821 = vmatpush2.msra.mxu0 0.0
        %822 = vmatprep.subr.mxu0 0.0
        %823 = vmatpush2.msra.mxu0 0.0
        %824 = vmatprep.subr.mxu0 0.0
        %825 = vmatpush2.msra.mxu0 0.0
        %826 = vmatprep.subr.mxu0 0.0
        %827 = vmatpush2.msra.mxu0 0.0
        %828 = vmatprep.subr.mxu0 0.0
        %829 = vmatpush2.msra.mxu0 0.0
        %830 = vmatprep.subr.mxu0 0.0
        %831 = vmatpush2.msra.mxu0 0.0
        %832 = vmatprep.mubr.f32.mxu0 0.0
        %833 = vmatmul.mubr.f32.gmra.mxu0 %v585
        %v834 = vpop.f32.mrf.mxu0
        %v835 = vadd.f32 0.0, %v834
        %v836 = vpop.f32.mrf.mxu0
        %837 = vmatprep.mubr.f32.mxu0 0.0
        %838 = vmatmul.mubr.f32.gmra.mxu0 %v588
        %v839 = vpop.f32.mrf.mxu0
        %v840 = vadd.f32 0.0, %v839
        %v841 = vpop.f32.mrf.mxu0
        %842 = vmatprep.mubr.f32.mxu0 0.0
        %843 = vmatmul.mubr.f32.gmra.mxu0 %v591
        %v844 = vpop.f32.mrf.mxu0
        %v845 = vadd.f32 0.0, %v844
        %v846 = vpop.f32.mrf.mxu0
        %847 = vdwg.mxu0
        %s848 = scalar_lea.vmem [#allocation11], 24
        %v849 = vld [vmem:[%s848] sm:$0xff]
        %v850 = vld [vmem:[%s848 + $0x8] sm:$0xff]
        %v851 = vld [vmem:[%s848 + $0x10] sm:$0xff]
        %v852 = vmul.f32 %v835, %v849
        %v853 = vmul.f32 %v840, %v850
        %v854 = vmul.f32 %v845, %v851
        %855 = vmatprep.subr.mxu0 0.0
        %856 = vmatpush1.msra.mxu0 0.0
        %857 = vmatprep.subr.mxu0 0.0
        %858 = vmatpush1.msra.mxu0 0.0
        %859 = vmatprep.subr.mxu0 0.0
        %860 = vmatpush1.msra.mxu0 0.0
        %861 = vmatprep.subr.mxu0 0.0
        %862 = vmatpush1.msra.mxu0 0.0
        %863 = vmatprep.subr.mxu0 0.0
        %864 = vmatpush1.msra.mxu0 0.0
        %865 = vmatprep.subr.mxu0 0.0
        %866 = vmatpush1.msra.mxu0 0.0
        %867 = vmatprep.subr.mxu0 0.0
        %868 = vmatpush1.msra.mxu0 0.0
        %869 = vmatprep.subr.mxu0 0.0
        %870 = vmatpush1.msra.mxu0 0.0
        %871 = vmatprep.subr.mxu0 0.0
        %872 = vmatpush1.msra.mxu0 0.0
        %873 = vmatprep.subr.mxu0 0.0
        %874 = vmatpush1.msra.mxu0 0.0
        %875 = vmatprep.subr.mxu0 0.0
        %876 = vmatpush1.msra.mxu0 0.0
        %877 = vmatprep.subr.mxu0 0.0
        %878 = vmatpush1.msra.mxu0 0.0
        %879 = vmatprep.subr.mxu0 0.0
        %880 = vmatpush1.msra.mxu0 0.0
        %881 = vmatprep.subr.mxu0 0.0
        %882 = vmatpush1.msra.mxu0 %v854
        %883 = vmatprep.subr.mxu0 0.0
        %884 = vmatpush1.msra.mxu0 %v853
        %885 = vmatprep.subr.mxu0 0.0
        %886 = vmatpush1.msra.mxu0 %v852
        %887 = vmatprep.subr.mxu0 0.0
        %888 = vmatpush2.msra.mxu0 0.0
        %889 = vmatprep.subr.mxu0 0.0
        %890 = vmatpush2.msra.mxu0 0.0
        %891 = vmatprep.subr.mxu0 0.0
        %892 = vmatpush2.msra.mxu0 0.0
        %893 = vmatprep.subr.mxu0 0.0
        %894 = vmatpush2.msra.mxu0 0.0
        %895 = vmatprep.subr.mxu0 0.0
        %896 = vmatpush2.msra.mxu0 0.0
        %897 = vmatprep.subr.mxu0 0.0
        %898 = vmatpush2.msra.mxu0 0.0
        %899 = vmatprep.subr.mxu0 0.0
        %900 = vmatpush2.msra.mxu0 0.0
        %901 = vmatprep.subr.mxu0 0.0
        %902 = vmatpush2.msra.mxu0 0.0
        %903 = vmatprep.subr.mxu0 0.0
        %904 = vmatpush2.msra.mxu0 0.0
        %905 = vmatprep.subr.mxu0 0.0
        %906 = vmatpush2.msra.mxu0 0.0
        %907 = vmatprep.subr.mxu0 0.0
        %908 = vmatpush2.msra.mxu0 0.0
        %909 = vmatprep.subr.mxu0 0.0
        %910 = vmatpush2.msra.mxu0 0.0
        %911 = vmatprep.subr.mxu0 0.0
        %912 = vmatpush2.msra.mxu0 0.0
        %913 = vmatprep.subr.mxu0 0.0
        %914 = vmatpush2.msra.mxu0 0.0
        %915 = vmatprep.subr.mxu0 0.0
        %916 = vmatpush2.msra.mxu0 0.0
        %917 = vmatprep.subr.mxu0 0.0
        %918 = vmatpush2.msra.mxu0 0.0
        %919 = vmatprep.mubr.f32.mxu0 0.0
        %920 = vmatmul.mubr.f32.gmra.mxu0 %v680
        %v921 = vpop.f32.mrf.mxu0
        %v922 = vadd.f32 0.0, %v921
        %v923 = vpop.f32.mrf.mxu0
        %924 = vmatprep.mubr.f32.mxu0 0.0
        %925 = vmatmul.mubr.f32.gmra.mxu0 %v683
        %v926 = vpop.f32.mrf.mxu0
        %v927 = vadd.f32 0.0, %v926
        %v928 = vpop.f32.mrf.mxu0
        %929 = vmatprep.mubr.f32.mxu0 0.0
        %930 = vmatmul.mubr.f32.gmra.mxu0 %v686
        %v931 = vpop.f32.mrf.mxu0
        %v932 = vadd.f32 0.0, %v931
        %v933 = vpop.f32.mrf.mxu0
        %934 = vdwg.mxu0
        %935 = vmatprep.subr.mxu0 0.0
        %936 = vmatpush1.msra.mxu0 0.0
        %937 = vmatprep.subr.mxu0 0.0
        %938 = vmatpush1.msra.mxu0 0.0
        %939 = vmatprep.subr.mxu0 0.0
        %940 = vmatpush1.msra.mxu0 0.0
        %941 = vmatprep.subr.mxu0 0.0
        %942 = vmatpush1.msra.mxu0 0.0
        %943 = vmatprep.subr.mxu0 0.0
        %944 = vmatpush1.msra.mxu0 0.0
        %945 = vmatprep.subr.mxu0 0.0
        %946 = vmatpush1.msra.mxu0 0.0
        %947 = vmatprep.subr.mxu0 0.0
        %948 = vmatpush1.msra.mxu0 0.0
        %949 = vmatprep.subr.mxu0 0.0
        %950 = vmatpush1.msra.mxu0 0.0
        %951 = vmatprep.subr.mxu0 0.0
        %952 = vmatpush1.msra.mxu0 0.0
        %953 = vmatprep.subr.mxu0 0.0
        %954 = vmatpush1.msra.mxu0 0.0
        %955 = vmatprep.subr.mxu0 0.0
        %956 = vmatpush1.msra.mxu0 0.0
        %957 = vmatprep.subr.mxu0 0.0
        %958 = vmatpush1.msra.mxu0 0.0
        %959 = vmatprep.subr.mxu0 0.0
        %960 = vmatpush1.msra.mxu0 0.0
        %961 = vmatprep.subr.mxu0 0.0
        %962 = vmatpush1.msra.mxu0 %v580
        %963 = vmatprep.subr.mxu0 0.0
        %964 = vmatpush1.msra.mxu0 %v575
        %965 = vmatprep.subr.mxu0 0.0
        %966 = vmatpush1.msra.mxu0 %v570
        %967 = vmatprep.subr.mxu0 0.0
        %968 = vmatpush2.msra.mxu0 0.0
        %969 = vmatprep.subr.mxu0 0.0
        %970 = vmatpush2.msra.mxu0 0.0
        %971 = vmatprep.subr.mxu0 0.0
        %972 = vmatpush2.msra.mxu0 0.0
        %973 = vmatprep.subr.mxu0 0.0
        %974 = vmatpush2.msra.mxu0 0.0
        %975 = vmatprep.subr.mxu0 0.0
        %976 = vmatpush2.msra.mxu0 0.0
        %977 = vmatprep.subr.mxu0 0.0
        %978 = vmatpush2.msra.mxu0 0.0
        %979 = vmatprep.subr.mxu0 0.0
        %980 = vmatpush2.msra.mxu0 0.0
        %981 = vmatprep.subr.mxu0 0.0
        %982 = vmatpush2.msra.mxu0 0.0
        %983 = vmatprep.subr.mxu0 0.0
        %984 = vmatpush2.msra.mxu0 0.0
        %985 = vmatprep.subr.mxu0 0.0
        %986 = vmatpush2.msra.mxu0 0.0
        %987 = vmatprep.subr.mxu0 0.0
        %988 = vmatpush2.msra.mxu0 0.0
        %989 = vmatprep.subr.mxu0 0.0
        %990 = vmatpush2.msra.mxu0 0.0
        %991 = vmatprep.subr.mxu0 0.0
        %992 = vmatpush2.msra.mxu0 0.0
        %993 = vmatprep.subr.mxu0 0.0
        %994 = vmatpush2.msra.mxu0 0.0
        %995 = vmatprep.subr.mxu0 0.0
        %996 = vmatpush2.msra.mxu0 0.0
        %997 = vmatprep.subr.mxu0 0.0
        %998 = vmatpush2.msra.mxu0 0.0
        %999 = vmatprep.mubr.f32.mxu0 0.0
        %1000 = vmatmul.mubr.f32.gmra.mxu0 %v585
        %v1001 = vpop.f32.mrf.mxu0
        %v1002 = vadd.f32 0.0, %v1001
        %v1003 = vpop.f32.mrf.mxu0
        %1004 = vmatprep.mubr.f32.mxu0 0.0
        %1005 = vmatmul.mubr.f32.gmra.mxu0 %v588
        %v1006 = vpop.f32.mrf.mxu0
        %v1007 = vadd.f32 0.0, %v1006
        %v1008 = vpop.f32.mrf.mxu0
        %1009 = vmatprep.mubr.f32.mxu0 0.0
        %1010 = vmatmul.mubr.f32.gmra.mxu0 %v591
        %v1011 = vpop.f32.mrf.mxu0
        %v1012 = vadd.f32 0.0, %v1011
        %v1013 = vpop.f32.mrf.mxu0
        %1014 = vdwg.mxu0
        %s1015 = scalar_lea.vmem [#allocation11], 48
        %v1016 = vld [vmem:[%s1015] sm:$0xff]
        %v1017 = vld [vmem:[%s1015 + $0x8] sm:$0xff]
        %v1018 = vld [vmem:[%s1015 + $0x10] sm:$0xff]
        %v1019 = vmul.f32 %v1002, %v1016
        %v1020 = vmul.f32 %v1007, %v1017
        %v1021 = vmul.f32 %v1012, %v1018
        %1022 = vmatprep.subr.mxu0 0.0
        %1023 = vmatpush1.msra.mxu0 0.0
        %1024 = vmatprep.subr.mxu0 0.0
        %1025 = vmatpush1.msra.mxu0 0.0
        %1026 = vmatprep.subr.mxu0 0.0
        %1027 = vmatpush1.msra.mxu0 0.0
        %1028 = vmatprep.subr.mxu0 0.0
        %1029 = vmatpush1.msra.mxu0 0.0
        %1030 = vmatprep.subr.mxu0 0.0
        %1031 = vmatpush1.msra.mxu0 0.0
        %1032 = vmatprep.subr.mxu0 0.0
        %1033 = vmatpush1.msra.mxu0 0.0
        %1034 = vmatprep.subr.mxu0 0.0
        %1035 = vmatpush1.msra.mxu0 0.0
        %1036 = vmatprep.subr.mxu0 0.0
        %1037 = vmatpush1.msra.mxu0 0.0
        %1038 = vmatprep.subr.mxu0 0.0
        %1039 = vmatpush1.msra.mxu0 0.0
        %1040 = vmatprep.subr.mxu0 0.0
        %1041 = vmatpush1.msra.mxu0 0.0
        %1042 = vmatprep.subr.mxu0 0.0
        %1043 = vmatpush1.msra.mxu0 0.0
        %1044 = vmatprep.subr.mxu0 0.0
        %1045 = vmatpush1.msra.mxu0 0.0
        %1046 = vmatprep.subr.mxu0 0.0
        %1047 = vmatpush1.msra.mxu0 0.0
        %1048 = vmatprep.subr.mxu0 0.0
        %1049 = vmatpush1.msra.mxu0 %v1021
        %1050 = vmatprep.subr.mxu0 0.0
        %1051 = vmatpush1.msra.mxu0 %v1020
        %1052 = vmatprep.subr.mxu0 0.0
        %1053 = vmatpush1.msra.mxu0 %v1019
        %1054 = vmatprep.subr.mxu0 0.0
        %1055 = vmatpush2.msra.mxu0 0.0
        %1056 = vmatprep.subr.mxu0 0.0
        %1057 = vmatpush2.msra.mxu0 0.0
        %1058 = vmatprep.subr.mxu0 0.0
        %1059 = vmatpush2.msra.mxu0 0.0
        %1060 = vmatprep.subr.mxu0 0.0
        %1061 = vmatpush2.msra.mxu0 0.0
        %1062 = vmatprep.subr.mxu0 0.0
        %1063 = vmatpush2.msra.mxu0 0.0
        %1064 = vmatprep.subr.mxu0 0.0
        %1065 = vmatpush2.msra.mxu0 0.0
        %1066 = vmatprep.subr.mxu0 0.0
        %1067 = vmatpush2.msra.mxu0 0.0
        %1068 = vmatprep.subr.mxu0 0.0
        %1069 = vmatpush2.msra.mxu0 0.0
        %1070 = vmatprep.subr.mxu0 0.0
        %1071 = vmatpush2.msra.mxu0 0.0
        %1072 = vmatprep.subr.mxu0 0.0
        %1073 = vmatpush2.msra.mxu0 0.0
        %1074 = vmatprep.subr.mxu0 0.0
        %1075 = vmatpush2.msra.mxu0 0.0
        %1076 = vmatprep.subr.mxu0 0.0
        %1077 = vmatpush2.msra.mxu0 0.0
        %1078 = vmatprep.subr.mxu0 0.0
        %1079 = vmatpush2.msra.mxu0 0.0
        %1080 = vmatprep.subr.mxu0 0.0
        %1081 = vmatpush2.msra.mxu0 0.0
        %1082 = vmatprep.subr.mxu0 0.0
        %1083 = vmatpush2.msra.mxu0 0.0
        %1084 = vmatprep.subr.mxu0 0.0
        %1085 = vmatpush2.msra.mxu0 0.0
        %1086 = vmatprep.mubr.f32.mxu0 0.0
        %1087 = vmatmul.mubr.f32.gmra.mxu0 %v680
        %v1088 = vpop.f32.mrf.mxu0
        %v1089 = vadd.f32 0.0, %v1088
        %v1090 = vpop.f32.mrf.mxu0
        %1091 = vmatprep.mubr.f32.mxu0 0.0
        %1092 = vmatmul.mubr.f32.gmra.mxu0 %v683
        %v1093 = vpop.f32.mrf.mxu0
        %v1094 = vadd.f32 0.0, %v1093
        %v1095 = vpop.f32.mrf.mxu0
        %1096 = vmatprep.mubr.f32.mxu0 0.0
        %1097 = vmatmul.mubr.f32.gmra.mxu0 %v686
        %v1098 = vpop.f32.mrf.mxu0
        %v1099 = vadd.f32 0.0, %v1098
        %v1100 = vpop.f32.mrf.mxu0
        %1101 = vdwg.mxu0
        %v1103 = vsel %vm445, %v755, 0
        %v1106 = vsel %vm445, %v760, 0
        %v1109 = vsel %vm445, %v765, 0
        %v1112 = vsel %vm445, %v922, 0
        %v1115 = vsel %vm445, %v927, 0
        %v1118 = vsel %vm445, %v932, 0
        %v1121 = vsel %vm445, %v1089, 0
        %v1124 = vsel %vm445, %v1094, 0
        %v1127 = vsel %vm445, %v1099, 0
        %1129 = vmatprep.subr.mxu0 0.0
        %1130 = vmatpush1.msra.mxu0 0.0
        %1131 = vmatprep.subr.mxu0 0.0
        %1132 = vmatpush1.msra.mxu0 0.0
        %1133 = vmatprep.subr.mxu0 0.0
        %1134 = vmatpush1.msra.mxu0 0.0
        %1135 = vmatprep.subr.mxu0 0.0
        %1136 = vmatpush1.msra.mxu0 0.0
        %1137 = vmatprep.subr.mxu0 0.0
        %1138 = vmatpush1.msra.mxu0 0.0
        %1139 = vmatprep.subr.mxu0 0.0
        %1140 = vmatpush1.msra.mxu0 0.0
        %1141 = vmatprep.subr.mxu0 0.0
        %1142 = vmatpush1.msra.mxu0 0.0
        %1143 = vmatprep.subr.mxu0 0.0
        %1144 = vmatpush1.msra.mxu0 0.0
        %1145 = vmatprep.subr.mxu0 0.0
        %1146 = vmatpush1.msra.mxu0 0.0
        %1147 = vmatprep.subr.mxu0 0.0
        %1148 = vmatpush1.msra.mxu0 0.0
        %1149 = vmatprep.subr.mxu0 0.0
        %1150 = vmatpush1.msra.mxu0 0.0
        %1151 = vmatprep.subr.mxu0 0.0
        %1152 = vmatpush1.msra.mxu0 0.0
        %1153 = vmatprep.subr.mxu0 0.0
        %1154 = vmatpush1.msra.mxu0 %v444
        %1155 = vmatprep.subr.mxu0 0.0
        %1156 = vmatpush1.msra.mxu0 %v443
        %1157 = vmatprep.subr.mxu0 0.0
        %1158 = vmatpush1.msra.mxu0 %v442
        %1159 = vmatprep.subr.mxu0 0.0
        %1160 = vmatpush1.msra.mxu0 %v441
        %1161 = vmatprep.subr.mxu0 0.0
        %1162 = vmatpush2.msra.mxu0 0.0
        %1163 = vmatprep.subr.mxu0 0.0
        %1164 = vmatpush2.msra.mxu0 0.0
        %1165 = vmatprep.subr.mxu0 0.0
        %1166 = vmatpush2.msra.mxu0 0.0
        %1167 = vmatprep.subr.mxu0 0.0
        %1168 = vmatpush2.msra.mxu0 0.0
        %1169 = vmatprep.subr.mxu0 0.0
        %1170 = vmatpush2.msra.mxu0 0.0
        %1171 = vmatprep.subr.mxu0 0.0
        %1172 = vmatpush2.msra.mxu0 0.0
        %1173 = vmatprep.subr.mxu0 0.0
        %1174 = vmatpush2.msra.mxu0 0.0
        %1175 = vmatprep.subr.mxu0 0.0
        %1176 = vmatpush2.msra.mxu0 0.0
        %1177 = vmatprep.subr.mxu0 0.0
        %1178 = vmatpush2.msra.mxu0 0.0
        %1179 = vmatprep.subr.mxu0 0.0
        %1180 = vmatpush2.msra.mxu0 0.0
        %1181 = vmatprep.subr.mxu0 0.0
        %1182 = vmatpush2.msra.mxu0 0.0
        %1183 = vmatprep.subr.mxu0 0.0
        %1184 = vmatpush2.msra.mxu0 0.0
        %1185 = vmatprep.subr.mxu0 0.0
        %1186 = vmatpush2.msra.mxu0 0.0
        %1187 = vmatprep.subr.mxu0 0.0
        %1188 = vmatpush2.msra.mxu0 0.0
        %1189 = vmatprep.subr.mxu0 0.0
        %1190 = vmatpush2.msra.mxu0 0.0
        %1191 = vmatprep.subr.mxu0 0.0
        %1192 = vmatpush2.msra.mxu0 0.0
        %1193 = vmatprep.mubr.f32.mxu0 0.0
        %1194 = vmatmul.mubr.f32.gmra.mxu0 %v1103
        %v1195 = vpop.f32.mrf.mxu0
        %v1196 = vadd.f32 0.0, %v1195
        %v1197 = vpop.f32.mrf.mxu0
        %1198 = vmatprep.mubr.f32.mxu0 0.0
        %1199 = vmatmul.mubr.f32.gmra.mxu0 %v1106
        %v1200 = vpop.f32.mrf.mxu0
        %v1201 = vadd.f32 0.0, %v1200
        %v1202 = vpop.f32.mrf.mxu0
        %1203 = vmatprep.mubr.f32.mxu0 0.0
        %1204 = vmatmul.mubr.f32.gmra.mxu0 %v1109
        %v1205 = vpop.f32.mrf.mxu0
        %v1206 = vadd.f32 0.0, %v1205
        %v1207 = vpop.f32.mrf.mxu0
        %1208 = vmatprep.mubr.f32.mxu0 0.0
        %1209 = vmatmul.mubr.f32.gmra.mxu0 %v1112
        %v1210 = vpop.f32.mrf.mxu0
        %v1211 = vadd.f32 0.0, %v1210
        %v1212 = vpop.f32.mrf.mxu0
        %1213 = vmatprep.mubr.f32.mxu0 0.0
        %1214 = vmatmul.mubr.f32.gmra.mxu0 %v1115
        %v1215 = vpop.f32.mrf.mxu0
        %v1216 = vadd.f32 0.0, %v1215
        %v1217 = vpop.f32.mrf.mxu0
        %1218 = vmatprep.mubr.f32.mxu0 0.0
        %1219 = vmatmul.mubr.f32.gmra.mxu0 %v1118
        %v1220 = vpop.f32.mrf.mxu0
        %v1221 = vadd.f32 0.0, %v1220
        %v1222 = vpop.f32.mrf.mxu0
        %1223 = vmatprep.mubr.f32.mxu0 0.0
        %1224 = vmatmul.mubr.f32.gmra.mxu0 %v1121
        %v1225 = vpop.f32.mrf.mxu0
        %v1226 = vadd.f32 0.0, %v1225
        %v1227 = vpop.f32.mrf.mxu0
        %1228 = vmatprep.mubr.f32.mxu0 0.0
        %1229 = vmatmul.mubr.f32.gmra.mxu0 %v1124
        %v1230 = vpop.f32.mrf.mxu0
        %v1231 = vadd.f32 0.0, %v1230
        %v1232 = vpop.f32.mrf.mxu0
        %1233 = vmatprep.mubr.f32.mxu0 0.0
        %1234 = vmatmul.mubr.f32.gmra.mxu0 %v1127
        %v1235 = vpop.f32.mrf.mxu0
        %v1236 = vadd.f32 0.0, %v1235
        %v1237 = vpop.f32.mrf.mxu0
        %1238 = vdwg.mxu0
        %v1239 = vmul.f32 %v1226, 1.13983
        %v1240 = vmul.f32 %v1231, 1.13983
        %v1241 = vmul.f32 %v1236, 1.13983
        %v1242 = vadd.f32 %v1196, %v1239
        %v1243 = vadd.f32 %v1201, %v1240
        %v1244 = vadd.f32 %v1206, %v1241
        %1245 = vst.msk [vmem:[%s372] sm:$0xff] %vm445, %v1242
        %1246 = vst.msk [vmem:[%s372 + $0x8] sm:$0xff] %vm445, %v1243
        %1247 = vst.msk [vmem:[%s372 + $0x10] sm:$0xff] %vm445, %v1244
        %v1248 = vmul.f32 %v1211, -0.39465
        %v1249 = vmul.f32 %v1216, -0.39465
        %v1250 = vmul.f32 %v1221, -0.39465
        %v1251 = vadd.f32 %v1196, %v1248
        %v1252 = vadd.f32 %v1201, %v1249
        %v1253 = vadd.f32 %v1206, %v1250
        %v1254 = vmul.f32 %v1226, -0.5806
        %v1255 = vmul.f32 %v1231, -0.5806
        %v1256 = vmul.f32 %v1236, -0.5806
        %v1257 = vadd.f32 %v1251, %v1254
        %v1258 = vadd.f32 %v1252, %v1255
        %v1259 = vadd.f32 %v1253, %v1256
        %s1260 = scalar_lea.vmem %s372, 24 [#allocation13]
        %1261 = vst.msk [vmem:[%s1260] sm:$0xff] %vm445, %v1257
        %1262 = vst.msk [vmem:[%s1260 + $0x8] sm:$0xff] %vm445, %v1258
        %1263 = vst.msk [vmem:[%s1260 + $0x10] sm:$0xff] %vm445, %v1259
        %v1264 = vmul.f32 %v1211, 2.03211
        %v1265 = vmul.f32 %v1216, 2.03211
        %v1266 = vmul.f32 %v1221, 2.03211
        %v1267 = vadd.f32 %v1196, %v1264
        %v1268 = vadd.f32 %v1201, %v1265
        %v1269 = vadd.f32 %v1206, %v1266
        %s1270 = scalar_lea.vmem %s372, 48 [#allocation13]
        %1271 = vst.msk [vmem:[%s1270] sm:$0xff] %vm445, %v1267
        %1272 = vst.msk [vmem:[%s1270 + $0x8] sm:$0xff] %vm445, %v1268
        %1273 = vst.msk [vmem:[%s1270 + $0x10] sm:$0xff] %vm445, %v1269
        %s1274 = sand.u32 %s192, 1
        %s1275 = scalar_lea.sflag [#allocation4], %s1274
        %s1276 = sand.u32 %s192, 1
        %s1277 = smul.addr %s1276, 72
        %s1278 = scalar_lea.vmem [#allocation13], %s1277
        // Predicated region
        $region69: #{tpu_custom_call.1} parent=43 // pred_check
          %p1279 = pneg %p202
        $region70: #{tpu_custom_call.1} parent=43 // pred_check_branch
          %1281 = sbr.rel (%p1279) target = $region72
        $region71: #{tpu_custom_call.1} parent=43 // pred_region
          %s1282 = smul.u32 3, %s32
          %s1284 = ssub.s32 1152, 1152
          %1285 = vsyncadd %s1275, %s1284
          %s1286 = sadd.s32 %s33, %s1282
          %s1287 = smul.addr %s31, 9
          %s1288 = sadd.s32 %s1286, %s1287
          %s1289 = smul.addr %s1288, 128
          %s1290 = scalar_lea.hbm %s6, %s1289
          %s1291 = sshll.u32 %s1278, 4
          %s1292 = int_to_ptr.vmem [resolvable:$true] %s1291
          %1297 = dma.vmem_to_hbm [thread:$0]  %s1292, 1152, %s1290, %s1275, 128, 128, 8
        $region72: #{tpu_custom_call.1} parent=43 // pred_fallthru
          _
      $region44: #{tpu_custom_call.1} parent=5 // pred_fallthru
        _
      %p1298 = scmp.le.s32.totalorder 2, %s21
      // Predicated region
      $region73: #{tpu_custom_call.1} parent=5 // pred_check
        %p1299 = pneg %p1298
      $region74: #{tpu_custom_call.1} parent=5 // pred_check_branch
        %1301 = sbr.rel (%p1299) target = $region76
      $region75: #{tpu_custom_call.1} parent=5 // pred_region
        %s1302 = ssub.s32 %s21, 2
        // Predicated region
        $region77: #{tpu_custom_call.1} parent=75 // pred_check
          %p1303 = pneg %p208
        $region78: #{tpu_custom_call.1} parent=75 // pred_check_branch
          %1305 = sbr.rel (%p1303) target = $region80
        $region79: #{tpu_custom_call.1} parent=75 // pred_region
          %s1306 = sand.u32 %s193, 1
          %s1307 = scalar_lea.sflag [#allocation4], %s1306
          %s1308 = sand.u32 %s193, 1
          %s1309 = smul.addr %s1308, 72
          %s1310 = scalar_lea.vmem [#allocation13], %s1309
          %1311 = dma.done %s1307, 1152
        $region80: #{tpu_custom_call.1} parent=75 // pred_fallthru
          _
      $region76: #{tpu_custom_call.1} parent=5 // pred_fallthru
        _
    $region6: #{tpu_custom_call.1} parent=1 // loop_footer
      %s25 = sadd.s32 1, %s21
    $region7: #{tpu_custom_call.1} parent=1 // loop_footer_branch
      %20 = sbr.rel target = $region3
    $region8: #{tpu_custom_call.1} parent=1 // loop_exit
      _
    %1312 = vsyncpa [#allocation3], 1
    %s1313 = scalar_lea.sflag [#allocation3], 1
    %1314 = vsyncpa %s1313, 1
    %1315 = vsyncpa [#allocation6], 1
    %1316 = vsyncpa [#allocation9], 1
    %1317 = vsyncpa [#allocation12], 1
    %1318 = vsyncpa [#allocation4], 1
    %s1319 = scalar_lea.sflag [#allocation4], 1
    %1320 = vsyncpa %s1319, 1

</llo_original>
